<compile_context>
chip_gen: v5e
topology: v5e:2x2
jax: 0.10.0
libtpu: 0.0.40
codegen_flags: <defaults>
</compile_context>

<pallas_src>
import jax
import jax.numpy as jnp
from jax.experimental import pallas as pl
from jax.experimental.pallas import tpu as pltpu

EPS = 1e-6
HEADS_PAD = 128  # lane-dense padded width for the 2 regression heads


# ---------------------------------------------------------------------------
# Kernel
# ---------------------------------------------------------------------------


def _rms_norm(x_f32, gamma_bf16):
    """RMSNorm in f32; gamma (1,H) broadcast over rows."""
    var = jnp.mean(x_f32 * x_f32, axis=-1, keepdims=True)
    return (x_f32 * jax.lax.rsqrt(var + EPS)) * gamma_bf16.astype(jnp.float32)


def fused_backbone_heads_kernel(
    x_hbm, pad_ref, cos_ref, sin_ref,
    vecs_ref, wqkv_ref, wo_ref, wgu_ref, wd_ref,
    fln_ref, wh_ref, bh_ref,
    out_ref,
    h_ref, mask_ref, dma_sem,
):
    """One Qwen2-style decoder layer per (batch, layer) grid step.

    h_ref   : (S,H) bf16 VMEM scratch — residual stream carried across layers.
    mask_ref: (S,S) f32  VMEM scratch — combined causal+padding additive mask,
              built once per batch at layer 0.
    """
    b = pl.program_id(0)
    layer = pl.program_id(1)
    n_layers = pl.num_programs(1)
    S, H = h_ref.shape

    # -------- layer-0 setup: seed residual stream + build additive mask -----
    @pl.when(layer == 0)
    def _():
        cp = pltpu.make_async_copy(x_hbm.at[b], h_ref, dma_sem)
        cp.start()
        # combined causal + key-padding additive mask (layer-invariant)
        row = jax.lax.broadcasted_iota(jnp.int32, (S, S), 0)
        col = jax.lax.broadcasted_iota(jnp.int32, (S, S), 1)
        causal = jnp.where(col <= row, 0.0, -1e9).astype(jnp.float32)
        mask_ref[...] = causal + pad_ref[0]          # (S,S) + (1,S)
        cp.wait()

    resid = h_ref[...]                               # (S,H) bf16

    vecs = vecs_ref[0]                               # (8,H) packed small vecs
    ln1 = vecs[0:1]                                  # (1,H)
    bq = vecs[1:2].astype(jnp.float32)
    bk = vecs[2:3].astype(jnp.float32)
    bv = vecs[3:4].astype(jnp.float32)
    ln2 = vecs[4:5]

    # --------------------------- attention block ---------------------------
    hn = _rms_norm(resid.astype(jnp.float32), ln1).astype(jnp.bfloat16)

    qkv = jnp.dot(hn, wqkv_ref[0],
                  preferred_element_type=jnp.float32)          # (S,3H) f32
    # fold the 1/sqrt(d) score scale into q (RoPE is linear, so it commutes)
    q = (qkv[:, :H] + bq) * (float(H) ** -0.5)
    k = qkv[:, H:2 * H] + bk
    v = qkv[:, 2 * H:] + bv

    # RoPE: rotate_half(x) == roll(x, H//2) * sign; sign pre-folded into sin.
    cos = cos_ref[...]                               # (S,H) f32
    sin = sin_ref[...]                               # (S,H) f32, sign-folded
    q = q * cos + pltpu.roll(q, shift=H // 2, axis=1) * sin
    k = k * cos + pltpu.roll(k, shift=H // 2, axis=1) * sin

    qb = q.astype(jnp.bfloat16)                      # bf16 MXU inputs
    kb = k.astype(jnp.bfloat16)
    vb = v.astype(jnp.bfloat16)

    scores = jax.lax.dot_general(qb, kb, (((1,), (1,)), ((), ())),
                                 preferred_element_type=jnp.float32)  # (S,S)
    scores = scores + mask_ref[...]                  # single additive mask add
    scores = scores - jnp.max(scores, axis=-1, keepdims=True)
    p = jnp.exp(scores)
    p = p * pl.reciprocal(jnp.sum(p, axis=-1, keepdims=True), approx=True)

    ctx = jnp.dot(p.astype(jnp.bfloat16), vb,
                  preferred_element_type=jnp.float32)           # (S,H)
    attn_out = jnp.dot(ctx.astype(jnp.bfloat16), wo_ref[0],
                       preferred_element_type=jnp.float32)
    h2 = resid + attn_out.astype(jnp.bfloat16)

    # --------------------------- SwiGLU MLP block ---------------------------
    hn2 = _rms_norm(h2.astype(jnp.float32), ln2).astype(jnp.bfloat16)
    gu = jnp.dot(hn2, wgu_ref[0],
                 preferred_element_type=jnp.float32)            # (S,2I)
    I = gu.shape[-1] // 2
    gate = gu[:, :I]
    up = gu[:, I:]
    act = (gate * jax.nn.sigmoid(gate) * up).astype(jnp.bfloat16)   # SiLU*up
    mlp_out = jnp.dot(act, wd_ref[0], preferred_element_type=jnp.float32)

    h_new = h2 + mlp_out.astype(jnp.bfloat16)
    h_ref[...] = h_new

    # --------- fused final RMSNorm + regression heads (last layer) ----------
    @pl.when(layer == n_layers - 1)
    def _():
        feat = h_new[S - 1:S, :].astype(jnp.float32)            # (1,H)
        var = jnp.mean(feat * feat, axis=-1, keepdims=True)
        fn = (feat * jax.lax.rsqrt(var + EPS)) * fln_ref[...].astype(jnp.float32)
        preds = jnp.dot(fn.astype(jnp.bfloat16), wh_ref[...],
                        preferred_element_type=jnp.float32)     # (1,HEADS_PAD)
        preds = preds + bh_ref[...].astype(jnp.float32)
        # f32 output (no extra in-kernel quantization); lane-dense store
        out_ref[...] = jnp.broadcast_to(preds[:, None, :], out_ref.shape)


# ---------------------------------------------------------------------------
# Wrapper (forward pass of RegressionModel)
# ---------------------------------------------------------------------------


def _vmem_limit_bytes():
    """Per-generation VMEM budget: ~54 MiB on v7x (64 MiB), ~110 MiB on v5e/v6e."""
    try:
        cap = pltpu.get_tpu_info().vmem_capacity_bytes
    except Exception:  # fall back to the conservative v7x figure
        cap = 64 * 1024 * 1024
    return int(min(cap * 85 // 100, 110 * 1024 * 1024))


@jax.jit
def regression_model_forward(params, input_ids, attention_mask):
    B, S = input_ids.shape
    H = params['emb'].shape[1]
    L = params['wqkv'].shape[0]
    I = params['wd'].shape[1]
    HP = params['w_heads_p'].shape[-1]

    # ---- glue: embedding gather (XLA), key-padding bias, RoPE tables ----
    x0 = params['emb'][input_ids]                                # (B,S,H) bf16
    pad_bias = jnp.where(attention_mask > 0, 0.0, -1e9).astype(jnp.float32)
    pad_bias = pad_bias.reshape(B, 1, S)

    pos = jnp.arange(S, dtype=jnp.float32)
    half = H // 2
    inv_freq = 1.0 / (10000.0 ** (jnp.arange(half, dtype=jnp.float32) / half))
    freqs = pos[:, None] * inv_freq[None, :]
    rope = jnp.concatenate([freqs, freqs], axis=-1)              # (S,H)
    sign = jnp.concatenate([-jnp.ones((half,), jnp.float32),
                            jnp.ones((half,), jnp.float32)])
    cos = jnp.cos(rope)                                          # f32 tables
    sin = jnp.sin(rope) * sign[None, :]                          # sign folded

    perl = lambda shp: pl.BlockSpec(shp, lambda b, l: (l, 0, 0))
    const2 = lambda shp: pl.BlockSpec(shp, lambda b, l: (0, 0))

    out_padded = pl.pallas_call(
        fused_backbone_heads_kernel,
        out_shape=jax.ShapeDtypeStruct((B, 8, HP), jnp.float32),
        grid_spec=pltpu.PrefetchScalarGridSpec(
            num_scalar_prefetch=0,
            grid=(B, L),
            in_specs=[
                pl.BlockSpec(memory_space=pl.ANY),          # embeddings in HBM
                pl.BlockSpec((1, 1, S), lambda b, l: (b, 0, 0)),  # pad bias
                const2((S, H)),                             # cos (f32)
                const2((S, H)),                             # sin (f32, signed)
                perl((1, 8, H)),                            # packed ln1/bq/bk/bv/ln2
                perl((1, H, 3 * H)),                        # fused Wqkv
                perl((1, H, H)),                            # Wo
                perl((1, H, 2 * I)),                        # fused Wgate|Wup
                perl((1, I, H)),                            # Wdown
                const2((1, H)),                             # final_ln
                const2((H, HP)),                            # padded heads weight
                const2((1, HP)),                            # padded heads bias
            ],
            out_specs=pl.BlockSpec((1, 8, HP), lambda b, l: (b, 0, 0)),
            scratch_shapes=[
                pltpu.VMEM((S, H), jnp.bfloat16),           # residual stream
                pltpu.VMEM((S, S), jnp.float32),            # causal+pad mask
                pltpu.SemaphoreType.DMA(()),                # embedding seed DMA
            ],
        ),
        compiler_params=pltpu.CompilerParams(
            dimension_semantics=("parallel", "arbitrary"),  # batch || , layer serial
            vmem_limit_bytes=_vmem_limit_bytes()),
    )(x0, pad_bias, cos, sin,
      params['vecs'], params['wqkv'], params['wo'], params['wgu'], params['wd'],
      params['final_ln'], params['w_heads_p'], params['b_heads_p'])

    # the reference regressor heads are bf16 nn.Linear -> bf16 preds; the kernel
    # keeps the head matmul in f32 and only quantizes here (single rounding).
    preds = out_padded[:, 0, :2].astype(jnp.bfloat16)
    pred_1 = preds[:, 0]   # == regressor_1(features).squeeze(-1)
    pred_2 = preds[:, 1]   # == regressor_2(features).squeeze(-1)
    return pred_1, pred_2


# ---------------------------------------------------------------------------
# Deterministic synthetic parameters
# ---------------------------------------------------------------------------


def init_params(key, *, vocab=512, hidden=128, inter=256, layers=2):
    ks = jax.random.split(key, 16)
    n = lambda k, shape, s=0.02: (jax.random.normal(k, shape, jnp.float32) * s
                                  ).astype(jnp.bfloat16)
    H, I, L, V = hidden, inter, layers, vocab

    # per-layer projection weights, fused along the output dim
    wq, wk, wv = n(ks[1], (L, H, H)), n(ks[3], (L, H, H)), n(ks[5], (L, H, H))
    wqkv = jnp.concatenate([wq, wk, wv], axis=-1)                # (L, H, 3H)
    wg, wu = n(ks[8], (L, H, I)), n(ks[9], (L, H, I))
    wgu = jnp.concatenate([wg, wu], axis=-1)                     # (L, H, 2I)

    # packed per-layer small vectors: rows = [ln1, bq, bk, bv, ln2, 0, 0, 0]
    vecs = jnp.zeros((L, 8, H), jnp.bfloat16)
    vecs = vecs.at[:, 0].set(jnp.ones((L, H), jnp.bfloat16))     # ln1
    vecs = vecs.at[:, 1].set(n(ks[2], (L, H)))                   # bq
    vecs = vecs.at[:, 2].set(n(ks[4], (L, H)))                   # bk
    vecs = vecs.at[:, 3].set(n(ks[6], (L, H)))                   # bv
    vecs = vecs.at[:, 4].set(jnp.ones((L, H), jnp.bfloat16))     # ln2

    # regression heads, zero-padded to a lane-dense 128-wide block:
    # column 0 -> regressor_1, column 1 -> regressor_2, columns 2..127 -> 0
    w2 = jax.random.normal(ks[11], (H, 2), jnp.float32) * 0.02
    b2 = jax.random.normal(ks[12], (2,), jnp.float32) * 0.02
    w_heads_p = jnp.zeros((H, HEADS_PAD), jnp.float32).at[:, :2].set(w2)
    b_heads_p = jnp.zeros((1, HEADS_PAD), jnp.float32).at[0, :2].set(b2)

    return dict(
        emb=n(ks[0], (V, H)),
        vecs=vecs,
        wqkv=wqkv,
        wo=n(ks[7], (L, H, H)),
        wgu=wgu,
        wd=n(ks[10], (L, I, H)),
        final_ln=jnp.ones((1, H), jnp.bfloat16),
        w_heads_p=w_heads_p.astype(jnp.bfloat16),
        b_heads_p=b_heads_p.astype(jnp.bfloat16),
        # buffers (unused in forward, kept for parity with the module)
        regressor_1_mean=jnp.float32(0.0), regressor_1_std=jnp.float32(1.0),
        regressor_2_mean=jnp.float32(0.0), regressor_2_std=jnp.float32(1.0),
    )


if __name__ == "__main__":
    key = jax.random.PRNGKey(0)
    k_param, k_ids = jax.random.split(key)

    B, S, V = 2, 8, 512
    params = init_params(k_param, vocab=V, hidden=128, inter=256, layers=2)

    input_ids = jax.random.randint(k_ids, (B, S), 0, V, dtype=jnp.int32)
    attention_mask = jnp.array(
        [[1, 1, 1, 1, 1, 1, 1, 1],
         [0, 0, 1, 1, 1, 1, 1, 1]], dtype=jnp.int32)

    pred_1, pred_2 = regression_model_forward(params, input_ids, attention_mask)
    jax.block_until_ready((pred_1, pred_2))

    assert pred_1.shape == (B,) and pred_2.shape == (B,)
    assert pred_1.dtype == jnp.bfloat16 and pred_2.dtype == jnp.bfloat16
    assert bool(jnp.all(jnp.isfinite(pred_1.astype(jnp.float32))))
    assert bool(jnp.all(jnp.isfinite(pred_2.astype(jnp.float32))))
    print("KERNEL_OK")
</pallas_src>

<mosaic_0001>
module attributes {stable_mosaic.version = 11 : i64} {
  func.func @fused_backbone_heads_kernel(%arg0: i32, %arg1: i32, %arg2: memref<2x8x128xbf16, #tpu.memory_space<any>>, %arg3: memref<1x1x8xf32, #tpu.memory_space<vmem>>, %arg4: memref<8x128xf32, #tpu.memory_space<vmem>>, %arg5: memref<8x128xf32, #tpu.memory_space<vmem>>, %arg6: memref<1x8x128xbf16, #tpu.memory_space<vmem>>, %arg7: memref<1x128x384xbf16, #tpu.memory_space<vmem>>, %arg8: memref<1x128x128xbf16, #tpu.memory_space<vmem>>, %arg9: memref<1x128x512xbf16, #tpu.memory_space<vmem>>, %arg10: memref<1x256x128xbf16, #tpu.memory_space<vmem>>, %arg11: memref<1x128xbf16, #tpu.memory_space<vmem>>, %arg12: memref<128x128xbf16, #tpu.memory_space<vmem>>, %arg13: memref<1x128xbf16, #tpu.memory_space<vmem>>, %arg14: memref<1x8x128xf32, #tpu.memory_space<vmem>>, %arg15: memref<8x128xbf16, #tpu.memory_space<vmem>>, %arg16: memref<8x8xf32, #tpu.memory_space<vmem>>, %arg17: memref<!tpu.dma_semaphore, #tpu.memory_space<semaphore_mem>>) attributes {dimension_semantics = [#tpu.dimension_semantics<parallel>, #tpu.dimension_semantics<arbitrary>], iteration_bounds = array<i64: 2, 2>, scalar_prefetch = 0 : i64, scratch_operands = 3 : i64, tpu.core_type = #tpu.core_type<tc>, window_params = [{}, {transform_indices = @transform_1, window_bounds = array<i64: 1, 1, 8>}, {pipeline_mode = #tpu.pipeline_mode<synchronous>, transform_indices = @transform_2, window_bounds = array<i64: 8, 128>}, {pipeline_mode = #tpu.pipeline_mode<synchronous>, transform_indices = @transform_3, window_bounds = array<i64: 8, 128>}, {transform_indices = @transform_4, window_bounds = array<i64: 1, 8, 128>}, {transform_indices = @transform_5, window_bounds = array<i64: 1, 128, 384>}, {transform_indices = @transform_6, window_bounds = array<i64: 1, 128, 128>}, {transform_indices = @transform_7, window_bounds = array<i64: 1, 128, 512>}, {transform_indices = @transform_8, window_bounds = array<i64: 1, 256, 128>}, {pipeline_mode = #tpu.pipeline_mode<synchronous>, transform_indices = @transform_9, window_bounds = array<i64: 1, 128>}, {pipeline_mode = #tpu.pipeline_mode<synchronous>, transform_indices = @transform_10, window_bounds = array<i64: 128, 128>}, {pipeline_mode = #tpu.pipeline_mode<synchronous>, transform_indices = @transform_11, window_bounds = array<i64: 1, 128>}, {transform_indices = @transform_12, window_bounds = array<i64: 1, 8, 128>}]} {
    %c0_i32 = arith.constant 0 : i32
    %0 = arith.cmpi eq, %arg1, %c0_i32 : i32
    %1 = arith.extui %0 : i1 to i32
    %c0_i32_0 = arith.constant 0 : i32
    %2 = arith.cmpi ne, %1, %c0_i32_0 : i32
    scf.if %2 {
      %c0_i32_42 = arith.constant 0 : i32
      %c0_i32_43 = arith.constant 0 : i32
      %114 = tpu.memref_slice %arg2[%arg0, %c0_i32_42, %c0_i32_43] : memref<2x8x128xbf16, #tpu.memory_space<any>> -> memref<1x8x128xbf16, #tpu.memory_space<any>>
      %115 = tpu.memref_squeeze %114 : memref<1x8x128xbf16, #tpu.memory_space<any>> -> memref<8x128xbf16, #tpu.memory_space<any>>
      tpu.enqueue_dma source(%115 : memref<8x128xbf16, #tpu.memory_space<any>>) target(%arg15 : memref<8x128xbf16, #tpu.memory_space<vmem>>) target_semaphore(%arg17 : memref<!tpu.dma_semaphore, #tpu.memory_space<semaphore_mem>>)
      %116 = tpu.iota {dimensions = array<i32: 0>} : vector<8x8xi32>
      %117 = tpu.iota {dimensions = array<i32: 1>} : vector<8x8xi32>
      %118 = arith.cmpi sle, %117, %116 : vector<8x8xi32>
      %cst_44 = arith.constant 0.000000e+00 : f32
      %cst_45 = arith.constant -1.000000e+09 : f32
      %119 = vector.broadcast %cst_44 : f32 to vector<8x8xf32>
      %120 = vector.broadcast %cst_45 : f32 to vector<8x8xf32>
      %121 = arith.select %118, %119, %120 : vector<8x8xi1>, vector<8x8xf32>
      %c0_46 = arith.constant 0 : index
      %c0_47 = arith.constant 0 : index
      %c0_48 = arith.constant 0 : index
      %122 = vector.load %arg3[%c0_46, %c0_47, %c0_48] : memref<1x1x8xf32, #tpu.memory_space<vmem>>, vector<1x1x8xf32>
      %123 = vector.shape_cast %122 : vector<1x1x8xf32> to vector<1x8xf32>
      %124 = vector.broadcast %123 : vector<1x8xf32> to vector<8x8xf32>
      %125 = arith.addf %121, %124 : vector<8x8xf32>
      %c0_49 = arith.constant 0 : index
      %c0_50 = arith.constant 0 : index
      %126 = vector.load %arg16[%c0_49, %c0_50] : memref<8x8xf32, #tpu.memory_space<vmem>>, vector<8x8xf32>
      tpu.vector_store %arg16[%c0_49, %c0_50], %125 {strides = array<i32>} : memref<8x8xf32, #tpu.memory_space<vmem>>, vector<8x8xf32>,
      %c0_i32_51 = arith.constant 0 : i32
      %c0_i32_52 = arith.constant 0 : i32
      %127 = tpu.memref_slice %arg2[%arg0, %c0_i32_51, %c0_i32_52] : memref<2x8x128xbf16, #tpu.memory_space<any>> -> memref<1x8x128xbf16, #tpu.memory_space<any>>
      %128 = tpu.memref_squeeze %127 : memref<1x8x128xbf16, #tpu.memory_space<any>> -> memref<8x128xbf16, #tpu.memory_space<any>>
      tpu.wait_dma2 semaphore(%arg17 : memref<!tpu.dma_semaphore, #tpu.memory_space<semaphore_mem>>) src(%128 : memref<8x128xbf16, #tpu.memory_space<any>>) dst(%arg15 : memref<8x128xbf16, #tpu.memory_space<vmem>>)
    } else {
    }
    %c0 = arith.constant 0 : index
    %c0_1 = arith.constant 0 : index
    %3 = vector.load %arg15[%c0, %c0_1] : memref<8x128xbf16, #tpu.memory_space<vmem>>, vector<8x128xbf16>
    %c0_2 = arith.constant 0 : index
    %c0_3 = arith.constant 0 : index
    %c0_4 = arith.constant 0 : index
    %4 = vector.load %arg6[%c0_2, %c0_3, %c0_4] : memref<1x8x128xbf16, #tpu.memory_space<vmem>>, vector<1x8x128xbf16>
    %5 = vector.shape_cast %4 : vector<1x8x128xbf16> to vector<8x128xbf16>
    %6 = vector.extract_strided_slice %5 {offsets = [0, 0], sizes = [1, 128], strides = [1, 1]} : vector<8x128xbf16> to vector<1x128xbf16>
    %7 = vector.extract_strided_slice %5 {offsets = [1, 0], sizes = [1, 128], strides = [1, 1]} : vector<8x128xbf16> to vector<1x128xbf16>
    %8 = arith.extf %7 : vector<1x128xbf16> to vector<1x128xf32>
    %9 = vector.extract_strided_slice %5 {offsets = [2, 0], sizes = [1, 128], strides = [1, 1]} : vector<8x128xbf16> to vector<1x128xbf16>
    %10 = arith.extf %9 : vector<1x128xbf16> to vector<1x128xf32>
    %11 = vector.extract_strided_slice %5 {offsets = [3, 0], sizes = [1, 128], strides = [1, 1]} : vector<8x128xbf16> to vector<1x128xbf16>
    %12 = arith.extf %11 : vector<1x128xbf16> to vector<1x128xf32>
    %13 = vector.extract_strided_slice %5 {offsets = [4, 0], sizes = [1, 128], strides = [1, 1]} : vector<8x128xbf16> to vector<1x128xbf16>
    %14 = arith.extf %3 : vector<8x128xbf16> to vector<8x128xf32>
    %15 = arith.mulf %14, %14 : vector<8x128xf32>
    %cst = arith.constant dense<0.000000e+00> : vector<8xf32>
    %16 = vector.multi_reduction <add>, %15, %cst [1] : vector<8x128xf32> to vector<8xf32>
    %17 = vector.shape_cast %16 : vector<8xf32> to vector<8x1xf32>
    %cst_5 = arith.constant 1.280000e+02 : f32
    %18 = vector.broadcast %cst_5 : f32 to vector<8x1xf32>
    %19 = arith.divf %17, %18 : vector<8x1xf32>
    %cst_6 = arith.constant 9.99999997E-7 : f32
    %20 = vector.broadcast %cst_6 : f32 to vector<8x1xf32>
    %21 = arith.addf %19, %20 : vector<8x1xf32>
    %22 = math.rsqrt %21 : vector<8x1xf32>
    %23 = vector.broadcast %22 : vector<8x1xf32> to vector<8x128xf32>
    %24 = arith.mulf %14, %23 : vector<8x128xf32>
    %25 = arith.extf %6 : vector<1x128xbf16> to vector<1x128xf32>
    %26 = vector.broadcast %25 : vector<1x128xf32> to vector<8x128xf32>
    %27 = arith.mulf %24, %26 : vector<8x128xf32>
    %28 = arith.truncf %27 : vector<8x128xf32> to vector<8x128xbf16>
    %c0_7 = arith.constant 0 : index
    %c0_8 = arith.constant 0 : index
    %c0_9 = arith.constant 0 : index
    %29 = vector.load %arg7[%c0_7, %c0_8, %c0_9] : memref<1x128x384xbf16, #tpu.memory_space<vmem>>, vector<1x128x384xbf16>
    %30 = vector.shape_cast %29 : vector<1x128x384xbf16> to vector<128x384xbf16>
    %cst_10 = arith.constant dense<0.000000e+00> : vector<8x384xf32>
    %31 = tpu.matmul %28, %30, %cst_10 {dimension_numbers = #tpu.dot_dimension_numbers<[1], [0], [0], [1], [0, 0, 1, 1], [], []>} : vector<8x128xbf16>, vector<128x384xbf16>, vector<8x384xf32> -> vector<8x384xf32>
    %32 = vector.extract_strided_slice %31 {offsets = [0, 0], sizes = [8, 128], strides = [1, 1]} : vector<8x384xf32> to vector<8x128xf32>
    %33 = vector.broadcast %8 : vector<1x128xf32> to vector<8x128xf32>
    %34 = arith.addf %32, %33 : vector<8x128xf32>
    %cst_11 = arith.constant 0.0883883461 : f32
    %35 = vector.broadcast %cst_11 : f32 to vector<8x128xf32>
    %36 = arith.mulf %34, %35 : vector<8x128xf32>
    %37 = vector.extract_strided_slice %31 {offsets = [0, 128], sizes = [8, 128], strides = [1, 1]} : vector<8x384xf32> to vector<8x128xf32>
    %38 = vector.broadcast %10 : vector<1x128xf32> to vector<8x128xf32>
    %39 = arith.addf %37, %38 : vector<8x128xf32>
    %40 = vector.extract_strided_slice %31 {offsets = [0, 256], sizes = [8, 128], strides = [1, 1]} : vector<8x384xf32> to vector<8x128xf32>
    %41 = vector.broadcast %12 : vector<1x128xf32> to vector<8x128xf32>
    %42 = arith.addf %40, %41 : vector<8x128xf32>
    %c0_12 = arith.constant 0 : index
    %c0_13 = arith.constant 0 : index
    %43 = vector.load %arg4[%c0_12, %c0_13] : memref<8x128xf32, #tpu.memory_space<vmem>>, vector<8x128xf32>
    %c0_14 = arith.constant 0 : index
    %c0_15 = arith.constant 0 : index
    %44 = vector.load %arg5[%c0_14, %c0_15] : memref<8x128xf32, #tpu.memory_space<vmem>>, vector<8x128xf32>
    %45 = arith.mulf %36, %43 : vector<8x128xf32>
    %c64_i32 = arith.constant 64 : i32
    %46 = tpu.dynamic_rotate %36 by %c64_i32 dim 1 : vector<8x128xf32>, i32 -> vector<8x128xf32>
    %47 = arith.mulf %46, %44 : vector<8x128xf32>
    %48 = arith.addf %45, %47 : vector<8x128xf32>
    %49 = arith.mulf %39, %43 : vector<8x128xf32>
    %c64_i32_16 = arith.constant 64 : i32
    %50 = tpu.dynamic_rotate %39 by %c64_i32_16 dim 1 : vector<8x128xf32>, i32 -> vector<8x128xf32>
    %51 = arith.mulf %50, %44 : vector<8x128xf32>
    %52 = arith.addf %49, %51 : vector<8x128xf32>
    %53 = arith.truncf %48 : vector<8x128xf32> to vector<8x128xbf16>
    %54 = arith.truncf %52 : vector<8x128xf32> to vector<8x128xbf16>
    %55 = arith.truncf %42 : vector<8x128xf32> to vector<8x128xbf16>
    %cst_17 = arith.constant dense<0.000000e+00> : vector<8x8xf32>
    %56 = tpu.matmul %53, %54, %cst_17 {dimension_numbers = #tpu.dot_dimension_numbers<[1], [1], [0], [0], [0, 0, 1, 0], [], []>} : vector<8x128xbf16>, vector<8x128xbf16>, vector<8x8xf32> -> vector<8x8xf32>
    %c0_18 = arith.constant 0 : index
    %c0_19 = arith.constant 0 : index
    %57 = vector.load %arg16[%c0_18, %c0_19] : memref<8x8xf32, #tpu.memory_space<vmem>>, vector<8x8xf32>
    %58 = arith.addf %56, %57 : vector<8x8xf32>
    %cst_20 = arith.constant dense<0xFF800000> : vector<8xf32>
    %59 = vector.multi_reduction <maximumf>, %58, %cst_20 [1] : vector<8x8xf32> to vector<8xf32>
    %60 = vector.shape_cast %59 : vector<8xf32> to vector<8x1xf32>
    %61 = vector.broadcast %60 : vector<8x1xf32> to vector<8x8xf32>
    %62 = arith.subf %58, %61 : vector<8x8xf32>
    %63 = math.exp %62 : vector<8x8xf32>
    %cst_21 = arith.constant dense<0.000000e+00> : vector<8xf32>
    %64 = vector.multi_reduction <add>, %63, %cst_21 [1] : vector<8x8xf32> to vector<8xf32>
    %65 = vector.shape_cast %64 : vector<8xf32> to vector<8x1xf32>
    %66 = tpu.reciprocal %65 {approx = true} : vector<8x1xf32> -> vector<8x1xf32>
    %67 = vector.broadcast %66 : vector<8x1xf32> to vector<8x8xf32>
    %68 = arith.mulf %63, %67 : vector<8x8xf32>
    %69 = arith.truncf %68 : vector<8x8xf32> to vector<8x8xbf16>
    %cst_22 = arith.constant dense<0.000000e+00> : vector<8x128xf32>
    %70 = tpu.matmul %69, %55, %cst_22 {dimension_numbers = #tpu.dot_dimension_numbers<[1], [0], [0], [1], [0, 0, 1, 1], [], []>} : vector<8x8xbf16>, vector<8x128xbf16>, vector<8x128xf32> -> vector<8x128xf32>
    %71 = arith.truncf %70 : vector<8x128xf32> to vector<8x128xbf16>
    %c0_23 = arith.constant 0 : index
    %c0_24 = arith.constant 0 : index
    %c0_25 = arith.constant 0 : index
    %72 = vector.load %arg8[%c0_23, %c0_24, %c0_25] : memref<1x128x128xbf16, #tpu.memory_space<vmem>>, vector<1x128x128xbf16>
    %73 = vector.shape_cast %72 : vector<1x128x128xbf16> to vector<128x128xbf16>
    %cst_26 = arith.constant dense<0.000000e+00> : vector<8x128xf32>
    %74 = tpu.matmul %71, %73, %cst_26 {dimension_numbers = #tpu.dot_dimension_numbers<[1], [0], [0], [1], [0, 0, 1, 1], [], []>} : vector<8x128xbf16>, vector<128x128xbf16>, vector<8x128xf32> -> vector<8x128xf32>
    %75 = arith.truncf %74 : vector<8x128xf32> to vector<8x128xbf16>
    %76 = arith.addf %3, %75 : vector<8x128xbf16>
    %77 = arith.extf %76 : vector<8x128xbf16> to vector<8x128xf32>
    %78 = arith.mulf %77, %77 : vector<8x128xf32>
    %cst_27 = arith.constant dense<0.000000e+00> : vector<8xf32>
    %79 = vector.multi_reduction <add>, %78, %cst_27 [1] : vector<8x128xf32> to vector<8xf32>
    %80 = vector.shape_cast %79 : vector<8xf32> to vector<8x1xf32>
    %cst_28 = arith.constant 1.280000e+02 : f32
    %81 = vector.broadcast %cst_28 : f32 to vector<8x1xf32>
    %82 = arith.divf %80, %81 : vector<8x1xf32>
    %cst_29 = arith.constant 9.99999997E-7 : f32
    %83 = vector.broadcast %cst_29 : f32 to vector<8x1xf32>
    %84 = arith.addf %82, %83 : vector<8x1xf32>
    %85 = math.rsqrt %84 : vector<8x1xf32>
    %86 = vector.broadcast %85 : vector<8x1xf32> to vector<8x128xf32>
    %87 = arith.mulf %77, %86 : vector<8x128xf32>
    %88 = arith.extf %13 : vector<1x128xbf16> to vector<1x128xf32>
    %89 = vector.broadcast %88 : vector<1x128xf32> to vector<8x128xf32>
    %90 = arith.mulf %87, %89 : vector<8x128xf32>
    %91 = arith.truncf %90 : vector<8x128xf32> to vector<8x128xbf16>
    %c0_30 = arith.constant 0 : index
    %c0_31 = arith.constant 0 : index
    %c0_32 = arith.constant 0 : index
    %92 = vector.load %arg9[%c0_30, %c0_31, %c0_32] : memref<1x128x512xbf16, #tpu.memory_space<vmem>>, vector<1x128x512xbf16>
    %93 = vector.shape_cast %92 : vector<1x128x512xbf16> to vector<128x512xbf16>
    %cst_33 = arith.constant dense<0.000000e+00> : vector<8x512xf32>
    %94 = tpu.matmul %91, %93, %cst_33 {dimension_numbers = #tpu.dot_dimension_numbers<[1], [0], [0], [1], [0, 0, 1, 1], [], []>} : vector<8x128xbf16>, vector<128x512xbf16>, vector<8x512xf32> -> vector<8x512xf32>
    %95 = vector.extract_strided_slice %94 {offsets = [0, 0], sizes = [8, 256], strides = [1, 1]} : vector<8x512xf32> to vector<8x256xf32>
    %96 = vector.extract_strided_slice %94 {offsets = [0, 256], sizes = [8, 256], strides = [1, 1]} : vector<8x512xf32> to vector<8x256xf32>
    %97 = arith.negf %95 : vector<8x256xf32>
    %98 = math.exp %97 : vector<8x256xf32>
    %cst_34 = arith.constant 1.000000e+00 : f32
    %99 = vector.broadcast %cst_34 : f32 to vector<8x256xf32>
    %100 = arith.addf %99, %98 : vector<8x256xf32>
    %101 = arith.divf %99, %100 : vector<8x256xf32>
    %102 = arith.mulf %95, %101 : vector<8x256xf32>
    %103 = arith.mulf %102, %96 : vector<8x256xf32>
    %104 = arith.truncf %103 : vector<8x256xf32> to vector<8x256xbf16>
    %c0_35 = arith.constant 0 : index
    %c0_36 = arith.constant 0 : index
    %c0_37 = arith.constant 0 : index
    %105 = vector.load %arg10[%c0_35, %c0_36, %c0_37] : memref<1x256x128xbf16, #tpu.memory_space<vmem>>, vector<1x256x128xbf16>
    %106 = vector.shape_cast %105 : vector<1x256x128xbf16> to vector<256x128xbf16>
    %cst_38 = arith.constant dense<0.000000e+00> : vector<8x128xf32>
    %107 = tpu.matmul %104, %106, %cst_38 {dimension_numbers = #tpu.dot_dimension_numbers<[1], [0], [0], [1], [0, 0, 1, 1], [], []>} : vector<8x256xbf16>, vector<256x128xbf16>, vector<8x128xf32> -> vector<8x128xf32>
    %108 = arith.truncf %107 : vector<8x128xf32> to vector<8x128xbf16>
    %109 = arith.addf %76, %108 : vector<8x128xbf16>
    %c0_39 = arith.constant 0 : index
    %c0_40 = arith.constant 0 : index
    %110 = vector.load %arg15[%c0_39, %c0_40] : memref<8x128xbf16, #tpu.memory_space<vmem>>, vector<8x128xbf16>
    tpu.vector_store %arg15[%c0_39, %c0_40], %109 {strides = array<i32>} : memref<8x128xbf16, #tpu.memory_space<vmem>>, vector<8x128xbf16>,
    %c1_i32 = arith.constant 1 : i32
    %111 = arith.cmpi eq, %arg1, %c1_i32 : i32
    %112 = arith.extui %111 : i1 to i32
    %c0_i32_41 = arith.constant 0 : i32
    %113 = arith.cmpi ne, %112, %c0_i32_41 : i32
    scf.if %113 {
      %114 = vector.extract_strided_slice %109 {offsets = [7, 0], sizes = [1, 128], strides = [1, 1]} : vector<8x128xbf16> to vector<1x128xbf16>
      %115 = arith.extf %114 : vector<1x128xbf16> to vector<1x128xf32>
      %116 = arith.mulf %115, %115 : vector<1x128xf32>
      %cst_42 = arith.constant dense<0.000000e+00> : vector<1xf32>
      %117 = vector.multi_reduction <add>, %116, %cst_42 [1] : vector<1x128xf32> to vector<1xf32>
      %118 = vector.shape_cast %117 : vector<1xf32> to vector<1x1xf32>
      %cst_43 = arith.constant 1.280000e+02 : f32
      %119 = vector.broadcast %cst_43 : f32 to vector<1x1xf32>
      %120 = arith.divf %118, %119 : vector<1x1xf32>
      %cst_44 = arith.constant 9.99999997E-7 : f32
      %121 = vector.broadcast %cst_44 : f32 to vector<1x1xf32>
      %122 = arith.addf %120, %121 : vector<1x1xf32>
      %123 = math.rsqrt %122 : vector<1x1xf32>
      %124 = vector.broadcast %123 : vector<1x1xf32> to vector<1x128xf32>
      %125 = arith.mulf %115, %124 : vector<1x128xf32>
      %c0_45 = arith.constant 0 : index
      %c0_46 = arith.constant 0 : index
      %126 = vector.load %arg11[%c0_45, %c0_46] : memref<1x128xbf16, #tpu.memory_space<vmem>>, vector<1x128xbf16>
      %127 = arith.extf %126 : vector<1x128xbf16> to vector<1x128xf32>
      %128 = arith.mulf %125, %127 : vector<1x128xf32>
      %129 = arith.truncf %128 : vector<1x128xf32> to vector<1x128xbf16>
      %c0_47 = arith.constant 0 : index
      %c0_48 = arith.constant 0 : index
      %130 = vector.load %arg12[%c0_47, %c0_48] : memref<128x128xbf16, #tpu.memory_space<vmem>>, vector<128x128xbf16>
      %cst_49 = arith.constant dense<0.000000e+00> : vector<1x128xf32>
      %131 = tpu.matmul %129, %130, %cst_49 {dimension_numbers = #tpu.dot_dimension_numbers<[1], [0], [0], [1], [0, 0, 1, 1], [], []>} : vector<1x128xbf16>, vector<128x128xbf16>, vector<1x128xf32> -> vector<1x128xf32>
      %c0_50 = arith.constant 0 : index
      %c0_51 = arith.constant 0 : index
      %132 = vector.load %arg13[%c0_50, %c0_51] : memref<1x128xbf16, #tpu.memory_space<vmem>>, vector<1x128xbf16>
      %133 = arith.extf %132 : vector<1x128xbf16> to vector<1x128xf32>
      %134 = arith.addf %131, %133 : vector<1x128xf32>
      %135 = vector.shape_cast %134 : vector<1x128xf32> to vector<1x1x128xf32>
      %136 = vector.shape_cast %135 : vector<1x1x128xf32> to vector<1x1x128xf32>
      %137 = vector.broadcast %136 : vector<1x1x128xf32> to vector<1x8x128xf32>
      %c0_52 = arith.constant 0 : index
      %c0_53 = arith.constant 0 : index
      %c0_54 = arith.constant 0 : index
      %138 = vector.load %arg14[%c0_52, %c0_53, %c0_54] : memref<1x8x128xf32, #tpu.memory_space<vmem>>, vector<1x8x128xf32>
      tpu.vector_store %arg14[%c0_52, %c0_53, %c0_54], %137 {strides = array<i32>} : memref<1x8x128xf32, #tpu.memory_space<vmem>>, vector<1x8x128xf32>,
    } else {
    }
    return
  }
  func.func @transform_1(%arg0: i32, %arg1: i32) -> (i32, i32, i32) {
    %c0_i32 = arith.constant 0 : i32
    %c0_i32_0 = arith.constant 0 : i32
    %c0_i32_1 = arith.constant 0 : i32
    return %arg0, %c0_i32, %c0_i32_0 : i32, i32, i32
  }
  func.func @transform_2(%arg0: i32, %arg1: i32) -> (i32, i32) {
    %c0_i32 = arith.constant 0 : i32
    %c0_i32_0 = arith.constant 0 : i32
    %c0_i32_1 = arith.constant 0 : i32
    return %c0_i32, %c0_i32_0 : i32, i32
  }
  func.func @transform_3(%arg0: i32, %arg1: i32) -> (i32, i32) {
    %c0_i32 = arith.constant 0 : i32
    %c0_i32_0 = arith.constant 0 : i32
    %c0_i32_1 = arith.constant 0 : i32
    return %c0_i32, %c0_i32_0 : i32, i32
  }
  func.func @transform_4(%arg0: i32, %arg1: i32) -> (i32, i32, i32) {
    %c0_i32 = arith.constant 0 : i32
    %c0_i32_0 = arith.constant 0 : i32
    %c0_i32_1 = arith.constant 0 : i32
    return %arg1, %c0_i32, %c0_i32_0 : i32, i32, i32
  }
  func.func @transform_5(%arg0: i32, %arg1: i32) -> (i32, i32, i32) {
    %c0_i32 = arith.constant 0 : i32
    %c0_i32_0 = arith.constant 0 : i32
    %c0_i32_1 = arith.constant 0 : i32
    return %arg1, %c0_i32, %c0_i32_0 : i32, i32, i32
  }
  func.func @transform_6(%arg0: i32, %arg1: i32) -> (i32, i32, i32) {
    %c0_i32 = arith.constant 0 : i32
    %c0_i32_0 = arith.constant 0 : i32
    %c0_i32_1 = arith.constant 0 : i32
    return %arg1, %c0_i32, %c0_i32_0 : i32, i32, i32
  }
  func.func @transform_7(%arg0: i32, %arg1: i32) -> (i32, i32, i32) {
    %c0_i32 = arith.constant 0 : i32
    %c0_i32_0 = arith.constant 0 : i32
    %c0_i32_1 = arith.constant 0 : i32
    return %arg1, %c0_i32, %c0_i32_0 : i32, i32, i32
  }
  func.func @transform_8(%arg0: i32, %arg1: i32) -> (i32, i32, i32) {
    %c0_i32 = arith.constant 0 : i32
    %c0_i32_0 = arith.constant 0 : i32
    %c0_i32_1 = arith.constant 0 : i32
    return %arg1, %c0_i32, %c0_i32_0 : i32, i32, i32
  }
  func.func @transform_9(%arg0: i32, %arg1: i32) -> (i32, i32) {
    %c0_i32 = arith.constant 0 : i32
    %c0_i32_0 = arith.constant 0 : i32
    %c0_i32_1 = arith.constant 0 : i32
    return %c0_i32, %c0_i32_0 : i32, i32
  }
  func.func @transform_10(%arg0: i32, %arg1: i32) -> (i32, i32) {
    %c0_i32 = arith.constant 0 : i32
    %c0_i32_0 = arith.constant 0 : i32
    %c0_i32_1 = arith.constant 0 : i32
    return %c0_i32, %c0_i32_0 : i32, i32
  }
  func.func @transform_11(%arg0: i32, %arg1: i32) -> (i32, i32) {
    %c0_i32 = arith.constant 0 : i32
    %c0_i32_0 = arith.constant 0 : i32
    %c0_i32_1 = arith.constant 0 : i32
    return %c0_i32, %c0_i32_0 : i32, i32
  }
  func.func @transform_12(%arg0: i32, %arg1: i32) -> (i32, i32, i32) {
    %c0_i32 = arith.constant 0 : i32
    %c0_i32_0 = arith.constant 0 : i32
    %c0_i32_1 = arith.constant 0 : i32
    return %arg0, %c0_i32, %c0_i32_0 : i32, i32, i32
  }
}

</mosaic_0001>

<llo_original>
// kernel: regression_model_forward.1
$region0: #{regression_model_forward.1}
  #allocation0 [shape = 'u32[]', space=smem, size = 0x4, offset = 0x4, fixed_abs, tag = 'smem constant byte address 0x4 - core index']
  #allocation1 [shape = 'u32[72,128]{1,0:T(1,128)}', space=vmem, size = 0x9000, scoped, tag = 'internal scratch']
  #allocation2 [shape = 'bf16[8,128]{1,0:T(8,128)(2,1)}', space=vmem, size = 0x800, scoped, tag = 'scratch operand']
  #allocation3 [shape = 'f32[8,8]{1,0:T(8,128)}', space=vmem, size = 0x1000, scoped, tag = 'scratch operand']
  #allocation4 [shape = 's32[1]{0}', space=sflag, size = 0x4, scoped, tag = 'scratch operand']
  #allocation12 [shape = 's32[]', space=sflag, size = 0x4, offset = 0, fixed_abs, tag = 'sflag constant byte address 0x0 - dummy sync flag']
  %s0 = inlined_call_operand.vmem [shape: bf16[2,8,128], index: 0, kind: input, shape index: {}]
  %s1 = inlined_call_operand.vmem [shape: f32[2,1,8], index: 1, kind: input, shape index: {}]
  %s2 = inlined_call_operand.vmem [shape: f32[8,128], index: 2, kind: input, shape index: {}]
  %s3 = inlined_call_operand.vmem [shape: f32[8,128], index: 3, kind: input, shape index: {}]
  %s4 = inlined_call_operand.vmem [shape: bf16[2,8,128], index: 4, kind: input, shape index: {}]
  %s5 = inlined_call_operand.hbm [shape: bf16[2,128,384], index: 5, kind: input, shape index: {}]
  %s6 = inlined_call_operand.hbm [shape: bf16[2,128,128], index: 6, kind: input, shape index: {}]
  %s7 = inlined_call_operand.hbm [shape: bf16[2,128,512], index: 7, kind: input, shape index: {}]
  %s8 = inlined_call_operand.hbm [shape: bf16[2,256,128], index: 8, kind: input, shape index: {}]
  %s9 = inlined_call_operand.vmem [shape: bf16[1,128], index: 9, kind: input, shape index: {}]
  %s10 = inlined_call_operand.vmem [shape: bf16[128,128], index: 10, kind: input, shape index: {}]
  %s11 = inlined_call_operand.vmem [shape: bf16[1,128], index: 11, kind: input, shape index: {}]
  %s12 = inlined_call_operand.vmem [shape: f32[2,8,128], index: 12, kind: output, shape index: {}]
  %s13 = sld [smem:[#allocation0]]
  $region131: #{regression_model_forward.1} parent=0
    _
  %s15 = ssub.s32 1, %s13
  %s16 = scalar_select 0, %s15, %s13
  $region1: #{regression_model_forward.1} parent=0
    #allocation5 [shape = 'u8[196608]{0}', space=vmem, size = 0x30000, scoped, tag = 'input window, operand 5']
    #allocation6 [shape = 's32[2]{0}', space=sflag, size = 0x8, scoped, tag = 'scoped memory for regression_model_forward.1']
    #allocation7 [shape = 'u8[65536]{0}', space=vmem, size = 0x10000, scoped, tag = 'input window, operand 6']
    #allocation8 [shape = 's32[2]{0}', space=sflag, size = 0x8, scoped, tag = 'scoped memory for regression_model_forward.1']
    #allocation9 [shape = 'u8[262144]{0}', space=vmem, size = 0x40000, scoped, tag = 'input window, operand 7']
    #allocation10 [shape = 'u8[131072]{0}', space=vmem, size = 0x20000, scoped, tag = 'input window, operand 8']
    #allocation11 [shape = 's32[2]{0}', space=sflag, size = 0x8, scoped, tag = 'scoped memory for regression_model_forward.1']
    %17 = vsyncpa [#allocation6], 0
    %s18 = scalar_lea.sflag [#allocation6], 1
    %19 = vsyncpa %s18, 0
    %20 = vsyncpa [#allocation8], 0
    %s21 = scalar_lea.sflag [#allocation8], 1
    %22 = vsyncpa %s21, 0
    %23 = vsyncpa [#allocation11], 0
    %s24 = scalar_lea.sflag [#allocation11], 1
    %25 = vsyncpa %s24, 0
    loop: start=0, step=1, limit=6
    $region2: #{regression_model_forward.1} parent=1 // loop_pre_header
      _
    $region3: #{regression_model_forward.1} parent=1 // loop_header
      %s27 = sphi 0, %s31
      %p28 = scmp.ge.s32.totalorder %s27, 6
      %s34 = sphi 0, %s46
      %s35 = sphi 0, %s42
      %s36 = sphi 0, %s34
      %s37 = sphi 0, %s35
      %s38 = sphi 0, %s36
      %s39 = sphi 0, %s37
      %s49 = sphi 0, %s51
      %s52 = sphi 0, %s49
      %s53 = sphi 0, %s52
      %s69 = sphi 0, %s53
      %s73 = sphi 0, %s73
      %s75 = sphi 0, %s73
      %s76 = sphi 0, %s75
      %s90 = sphi 0, %s76
      %s94 = sphi 0, %s94
      %s96 = sphi 0, %s94
      %s97 = sphi 0, %s96
      %s111 = sphi 0, %s97
      %s117 = sphi 0, %s119
      %s120 = sphi 0, %s117
      %s121 = sphi 0, %s120
      %s137 = sphi 0, %s121
      %s143 = sphi 0, %s145
      %s146 = sphi 0, %s143
      %s147 = sphi 0, %s146
      %s163 = sphi 0, %s147
      %s169 = sphi 0, %s171
      %s172 = sphi 0, %s169
      %s173 = sphi 0, %s172
      %s189 = sphi 0, %s173
      %s195 = sphi 0, %s197
      %s198 = sphi 0, %s195
      %s199 = sphi 0, %s198
      %s215 = sphi 0, %s199
      %s221 = sphi 0, %s223
      %s224 = sphi 0, %s221
      %s225 = sphi 0, %s224
      %s241 = sphi 0, %s225
      %s245 = sphi 0, %s245
      %s247 = sphi 0, %s245
      %s248 = sphi 0, %s247
      %s262 = sphi 0, %s248
      %s266 = sphi 0, %s266
      %s268 = sphi 0, %s266
      %s269 = sphi 0, %s268
      %s283 = sphi 0, %s269
      %s287 = sphi 0, %s287
      %s289 = sphi 0, %s287
      %s290 = sphi 0, %s289
      %s304 = sphi 0, %s290
      %s310 = sphi 0, %s312
      %s313 = sphi 0, %s310
      %s314 = sphi 0, %s313
      %s330 = sphi 0, %s314
    $region4: #{regression_model_forward.1} parent=1 // loop_header_branch
      %30 = sbr.rel (%p28) target = $region8
    $region5: #{regression_model_forward.1} parent=1 // loop_body
      %s32 = ssub.s32 %s27, 1
      %s33 = ssub.s32 %s27, 2
      %s40 = sadd.s32 1, %s35
      %p41 = scmp.ge.s32.totalorder %s40, 2
      %s42 = scalar_select %p41, 0, %s40
      %s43 = sadd.s32 1, %s34
      %s44 = scalar_select %p41, %s43, %s34
      %p45 = scmp.ge.s32.totalorder %s44, 2
      %s46 = scalar_select %p45, 0, %s44
      %s47 = ssub.s32 %s34, %s46
      %p48 = scmp.eq.s32.totalorder %s47, 0
      %s50 = sadd.s32 %s49, 1
      %s51 = scalar_select %p48, %s49, %s50
      %p54 = pneg %p48
      %p55 = scmp.eq.s32.totalorder %s27, 3
      %p56 = por %p54, %p55
      %p57 = scmp.ne.s32.totalorder %s49, %s52
      %p58 = scmp.eq.s32.totalorder %s27, 0
      %p59 = por %p57, %p58
      %p60 = scmp.ne.s32.totalorder %s49, %s52
      %p61 = scmp.eq.s32.totalorder %s32, 3
      %p62 = por %p60, %p61
      %p63 = scmp.ne.s32.totalorder %s52, %s53
      %p64 = scmp.eq.s32.totalorder %s32, 0
      %p65 = por %p63, %p64
      %p66 = scmp.ne.s32.totalorder %s52, %s53
      %p67 = scmp.eq.s32.totalorder %s33, 3
      %p68 = por %p66, %p67
      %p70 = scmp.ne.s32.totalorder %s53, %s69
      %p71 = scmp.eq.s32.totalorder %s33, 0
      %p72 = por %p70, %p71
      %s74 = sadd.s32 %s73, 1
      %p77 = scmp.eq.s32.totalorder %s27, 3
      %p78 = scmp.ne.s32.totalorder %s73, %s75
      %p79 = scmp.eq.s32.totalorder %s27, 0
      %p80 = por %p78, %p79
      %p81 = scmp.ne.s32.totalorder %s73, %s75
      %p82 = scmp.eq.s32.totalorder %s32, 3
      %p83 = por %p81, %p82
      %p84 = scmp.ne.s32.totalorder %s75, %s76
      %p85 = scmp.eq.s32.totalorder %s32, 0
      %p86 = por %p84, %p85
      %p87 = scmp.ne.s32.totalorder %s75, %s76
      %p88 = scmp.eq.s32.totalorder %s33, 3
      %p89 = por %p87, %p88
      %p91 = scmp.ne.s32.totalorder %s76, %s90
      %p92 = scmp.eq.s32.totalorder %s33, 0
      %p93 = por %p91, %p92
      %s95 = sadd.s32 %s94, 1
      %p98 = scmp.eq.s32.totalorder %s27, 3
      %p99 = scmp.ne.s32.totalorder %s94, %s96
      %p100 = scmp.eq.s32.totalorder %s27, 0
      %p101 = por %p99, %p100
      %p102 = scmp.ne.s32.totalorder %s94, %s96
      %p103 = scmp.eq.s32.totalorder %s32, 3
      %p104 = por %p102, %p103
      %p105 = scmp.ne.s32.totalorder %s96, %s97
      %p106 = scmp.eq.s32.totalorder %s32, 0
      %p107 = por %p105, %p106
      %p108 = scmp.ne.s32.totalorder %s96, %s97
      %p109 = scmp.eq.s32.totalorder %s33, 3
      %p110 = por %p108, %p109
      %p112 = scmp.ne.s32.totalorder %s97, %s111
      %p113 = scmp.eq.s32.totalorder %s33, 0
      %p114 = por %p112, %p113
      %s115 = ssub.s32 %s35, %s42
      %p116 = scmp.eq.s32.totalorder %s115, 0
      %s118 = sadd.s32 %s117, 1
      %s119 = scalar_select %p116, %s117, %s118
      %p122 = pneg %p116
      %p123 = scmp.eq.s32.totalorder %s27, 3
      %p124 = por %p122, %p123
      %p125 = scmp.ne.s32.totalorder %s117, %s120
      %p126 = scmp.eq.s32.totalorder %s27, 0
      %p127 = por %p125, %p126
      %p128 = scmp.ne.s32.totalorder %s117, %s120
      %p129 = scmp.eq.s32.totalorder %s32, 3
      %p130 = por %p128, %p129
      %p131 = scmp.ne.s32.totalorder %s120, %s121
      %p132 = scmp.eq.s32.totalorder %s32, 0
      %p133 = por %p131, %p132
      %p134 = scmp.ne.s32.totalorder %s120, %s121
      %p135 = scmp.eq.s32.totalorder %s33, 3
      %p136 = por %p134, %p135
      %p138 = scmp.ne.s32.totalorder %s121, %s137
      %p139 = scmp.eq.s32.totalorder %s33, 0
      %p140 = por %p138, %p139
      %s141 = ssub.s32 %s35, %s42
      %p142 = scmp.eq.s32.totalorder %s141, 0
      %s144 = sadd.s32 %s143, 1
      %s145 = scalar_select %p142, %s143, %s144
      %p148 = pneg %p142
      %p149 = scmp.eq.s32.totalorder %s27, 3
      %p150 = por %p148, %p149
      %p151 = scmp.ne.s32.totalorder %s143, %s146
      %p152 = scmp.eq.s32.totalorder %s27, 0
      %p153 = por %p151, %p152
      %p154 = scmp.ne.s32.totalorder %s143, %s146
      %p155 = scmp.eq.s32.totalorder %s32, 3
      %p156 = por %p154, %p155
      %p157 = scmp.ne.s32.totalorder %s146, %s147
      %p158 = scmp.eq.s32.totalorder %s32, 0
      %p159 = por %p157, %p158
      %p160 = scmp.ne.s32.totalorder %s146, %s147
      %p161 = scmp.eq.s32.totalorder %s33, 3
      %p162 = por %p160, %p161
      %p164 = scmp.ne.s32.totalorder %s147, %s163
      %p165 = scmp.eq.s32.totalorder %s33, 0
      %p166 = por %p164, %p165
      %s167 = ssub.s32 %s35, %s42
      %p168 = scmp.eq.s32.totalorder %s167, 0
      %s170 = sadd.s32 %s169, 1
      %s171 = scalar_select %p168, %s169, %s170
      %p174 = pneg %p168
      %p175 = scmp.eq.s32.totalorder %s27, 3
      %p176 = por %p174, %p175
      %p177 = scmp.ne.s32.totalorder %s169, %s172
      %p178 = scmp.eq.s32.totalorder %s27, 0
      %p179 = por %p177, %p178
      %p180 = scmp.ne.s32.totalorder %s169, %s172
      %p181 = scmp.eq.s32.totalorder %s32, 3
      %p182 = por %p180, %p181
      %p183 = scmp.ne.s32.totalorder %s172, %s173
      %p184 = scmp.eq.s32.totalorder %s32, 0
      %p185 = por %p183, %p184
      %p186 = scmp.ne.s32.totalorder %s172, %s173
      %p187 = scmp.eq.s32.totalorder %s33, 3
      %p188 = por %p186, %p187
      %p190 = scmp.ne.s32.totalorder %s173, %s189
      %p191 = scmp.eq.s32.totalorder %s33, 0
      %p192 = por %p190, %p191
      %s193 = ssub.s32 %s35, %s42
      %p194 = scmp.eq.s32.totalorder %s193, 0
      %s196 = sadd.s32 %s195, 1
      %s197 = scalar_select %p194, %s195, %s196
      %p200 = pneg %p194
      %p201 = scmp.eq.s32.totalorder %s27, 3
      %p202 = por %p200, %p201
      %p203 = scmp.ne.s32.totalorder %s195, %s198
      %p204 = scmp.eq.s32.totalorder %s27, 0
      %p205 = por %p203, %p204
      %p206 = scmp.ne.s32.totalorder %s195, %s198
      %p207 = scmp.eq.s32.totalorder %s32, 3
      %p208 = por %p206, %p207
      %p209 = scmp.ne.s32.totalorder %s198, %s199
      %p210 = scmp.eq.s32.totalorder %s32, 0
      %p211 = por %p209, %p210
      %p212 = scmp.ne.s32.totalorder %s198, %s199
      %p213 = scmp.eq.s32.totalorder %s33, 3
      %p214 = por %p212, %p213
      %p216 = scmp.ne.s32.totalorder %s199, %s215
      %p217 = scmp.eq.s32.totalorder %s33, 0
      %p218 = por %p216, %p217
      %s219 = ssub.s32 %s35, %s42
      %p220 = scmp.eq.s32.totalorder %s219, 0
      %s222 = sadd.s32 %s221, 1
      %s223 = scalar_select %p220, %s221, %s222
      %p226 = pneg %p220
      %p227 = scmp.eq.s32.totalorder %s27, 3
      %p228 = por %p226, %p227
      %p229 = scmp.ne.s32.totalorder %s221, %s224
      %p230 = scmp.eq.s32.totalorder %s27, 0
      %p231 = por %p229, %p230
      %p232 = scmp.ne.s32.totalorder %s221, %s224
      %p233 = scmp.eq.s32.totalorder %s32, 3
      %p234 = por %p232, %p233
      %p235 = scmp.ne.s32.totalorder %s224, %s225
      %p236 = scmp.eq.s32.totalorder %s32, 0
      %p237 = por %p235, %p236
      %p238 = scmp.ne.s32.totalorder %s224, %s225
      %p239 = scmp.eq.s32.totalorder %s33, 3
      %p240 = por %p238, %p239
      %p242 = scmp.ne.s32.totalorder %s225, %s241
      %p243 = scmp.eq.s32.totalorder %s33, 0
      %p244 = por %p242, %p243
      %s246 = sadd.s32 %s245, 1
      %p249 = scmp.eq.s32.totalorder %s27, 3
      %p250 = scmp.ne.s32.totalorder %s245, %s247
      %p251 = scmp.eq.s32.totalorder %s27, 0
      %p252 = por %p250, %p251
      %p253 = scmp.ne.s32.totalorder %s245, %s247
      %p254 = scmp.eq.s32.totalorder %s32, 3
      %p255 = por %p253, %p254
      %p256 = scmp.ne.s32.totalorder %s247, %s248
      %p257 = scmp.eq.s32.totalorder %s32, 0
      %p258 = por %p256, %p257
      %p259 = scmp.ne.s32.totalorder %s247, %s248
      %p260 = scmp.eq.s32.totalorder %s33, 3
      %p261 = por %p259, %p260
      %p263 = scmp.ne.s32.totalorder %s248, %s262
      %p264 = scmp.eq.s32.totalorder %s33, 0
      %p265 = por %p263, %p264
      %s267 = sadd.s32 %s266, 1
      %p270 = scmp.eq.s32.totalorder %s27, 3
      %p271 = scmp.ne.s32.totalorder %s266, %s268
      %p272 = scmp.eq.s32.totalorder %s27, 0
      %p273 = por %p271, %p272
      %p274 = scmp.ne.s32.totalorder %s266, %s268
      %p275 = scmp.eq.s32.totalorder %s32, 3
      %p276 = por %p274, %p275
      %p277 = scmp.ne.s32.totalorder %s268, %s269
      %p278 = scmp.eq.s32.totalorder %s32, 0
      %p279 = por %p277, %p278
      %p280 = scmp.ne.s32.totalorder %s268, %s269
      %p281 = scmp.eq.s32.totalorder %s33, 3
      %p282 = por %p280, %p281
      %p284 = scmp.ne.s32.totalorder %s269, %s283
      %p285 = scmp.eq.s32.totalorder %s33, 0
      %p286 = por %p284, %p285
      %s288 = sadd.s32 %s287, 1
      %p291 = scmp.eq.s32.totalorder %s27, 3
      %p292 = scmp.ne.s32.totalorder %s287, %s289
      %p293 = scmp.eq.s32.totalorder %s27, 0
      %p294 = por %p292, %p293
      %p295 = scmp.ne.s32.totalorder %s287, %s289
      %p296 = scmp.eq.s32.totalorder %s32, 3
      %p297 = por %p295, %p296
      %p298 = scmp.ne.s32.totalorder %s289, %s290
      %p299 = scmp.eq.s32.totalorder %s32, 0
      %p300 = por %p298, %p299
      %p301 = scmp.ne.s32.totalorder %s289, %s290
      %p302 = scmp.eq.s32.totalorder %s33, 3
      %p303 = por %p301, %p302
      %p305 = scmp.ne.s32.totalorder %s290, %s304
      %p306 = scmp.eq.s32.totalorder %s33, 0
      %p307 = por %p305, %p306
      %s308 = ssub.s32 %s34, %s46
      %p309 = scmp.eq.s32.totalorder %s308, 0
      %s311 = sadd.s32 %s310, 1
      %s312 = scalar_select %p309, %s310, %s311
      %p315 = pneg %p309
      %p316 = scmp.eq.s32.totalorder %s27, 3
      %p317 = por %p315, %p316
      %p318 = scmp.ne.s32.totalorder %s310, %s313
      %p319 = scmp.eq.s32.totalorder %s27, 0
      %p320 = por %p318, %p319
      %p321 = scmp.ne.s32.totalorder %s310, %s313
      %p322 = scmp.eq.s32.totalorder %s32, 3
      %p323 = por %p321, %p322
      %p324 = scmp.ne.s32.totalorder %s313, %s314
      %p325 = scmp.eq.s32.totalorder %s32, 0
      %p326 = por %p324, %p325
      %p327 = scmp.ne.s32.totalorder %s313, %s314
      %p328 = scmp.eq.s32.totalorder %s33, 3
      %p329 = por %p327, %p328
      %p331 = scmp.ne.s32.totalorder %s314, %s330
      %p332 = scmp.eq.s32.totalorder %s33, 0
      %p333 = por %p331, %p332
      %p334 = scmp.le.s32.totalorder 1, %s27
      %p335 = scmp.lt.s32.totalorder %s27, 5
      %p336 = pnand %p334, %p335
      %p337 = pneg %p336
      // Predicated region
      $region9: #{regression_model_forward.1} parent=5 // pred_check
        _
      $region10: #{regression_model_forward.1} parent=5 // pred_check_branch
        %339 = sbr.rel (%p336) target = $region12
      $region11: #{regression_model_forward.1} parent=5 // pred_region
        %s340 = ssub.s32 %s27, 1
        // Predicated region
        $region13: #{regression_model_forward.1} parent=11 // pred_check
          %p341 = pneg %p86
        $region14: #{regression_model_forward.1} parent=11 // pred_check_branch
          %343 = sbr.rel (%p341) target = $region16
        $region15: #{regression_model_forward.1} parent=11 // pred_region
          _
        $region16: #{regression_model_forward.1} parent=11 // pred_fallthru
          _
        // Predicated region
        $region17: #{regression_model_forward.1} parent=11 // pred_check
          %p344 = pneg %p107
        $region18: #{regression_model_forward.1} parent=11 // pred_check_branch
          %346 = sbr.rel (%p344) target = $region20
        $region19: #{regression_model_forward.1} parent=11 // pred_region
          _
        $region20: #{regression_model_forward.1} parent=11 // pred_fallthru
          _
        // Predicated region
        $region21: #{regression_model_forward.1} parent=11 // pred_check
          %p347 = pneg %p258
        $region22: #{regression_model_forward.1} parent=11 // pred_check_branch
          %349 = sbr.rel (%p347) target = $region24
        $region23: #{regression_model_forward.1} parent=11 // pred_region
          _
        $region24: #{regression_model_forward.1} parent=11 // pred_fallthru
          _
        // Predicated region
        $region25: #{regression_model_forward.1} parent=11 // pred_check
          %p350 = pneg %p279
        $region26: #{regression_model_forward.1} parent=11 // pred_check_branch
          %352 = sbr.rel (%p350) target = $region28
        $region27: #{regression_model_forward.1} parent=11 // pred_region
          _
        $region28: #{regression_model_forward.1} parent=11 // pred_fallthru
          _
        // Predicated region
        $region29: #{regression_model_forward.1} parent=11 // pred_check
          %p353 = pneg %p300
        $region30: #{regression_model_forward.1} parent=11 // pred_check_branch
          %355 = sbr.rel (%p353) target = $region32
        $region31: #{regression_model_forward.1} parent=11 // pred_region
          _
        $region32: #{regression_model_forward.1} parent=11 // pred_fallthru
          _
      $region12: #{regression_model_forward.1} parent=5 // pred_fallthru
        _
      %p356 = scmp.lt.s32.totalorder %s27, 4
      // Predicated region
      $region33: #{regression_model_forward.1} parent=5 // pred_check
        %p357 = pneg %p356
      $region34: #{regression_model_forward.1} parent=5 // pred_check_branch
        %359 = sbr.rel (%p357) target = $region36
      $region35: #{regression_model_forward.1} parent=5 // pred_region
        // Predicated region
        $region37: #{regression_model_forward.1} parent=35 // pred_check
          %p360 = pneg %p59
        $region38: #{regression_model_forward.1} parent=35 // pred_check_branch
          %362 = sbr.rel (%p360) target = $region40
        $region39: #{regression_model_forward.1} parent=35 // pred_region
          %p363 = scmp.lt.s32.totalorder %s34, 1
          %s364 = scalar_select %p363, %s34, 1
          %s365 = scalar_lea.vmem %s1, %s364
        $region40: #{regression_model_forward.1} parent=35 // pred_fallthru
          _
        // Predicated region
        $region41: #{regression_model_forward.1} parent=35 // pred_check
          %p366 = pneg %p127
        $region42: #{regression_model_forward.1} parent=35 // pred_check_branch
          %368 = sbr.rel (%p366) target = $region44
        $region43: #{regression_model_forward.1} parent=35 // pred_region
          %p369 = scmp.lt.s32.totalorder %s35, 1
          %s370 = scalar_select %p369, %s35, 1
          %s371 = smul.addr %s370, 4
          %s372 = scalar_lea.vmem %s4, %s371
        $region44: #{regression_model_forward.1} parent=35 // pred_fallthru
          _
        // Predicated region
        $region45: #{regression_model_forward.1} parent=35 // pred_check
          %p373 = pneg %p153
        $region46: #{regression_model_forward.1} parent=35 // pred_check_branch
          %375 = sbr.rel (%p373) target = $region48
        $region47: #{regression_model_forward.1} parent=35 // pred_region
          %s376 = sand.u32 %s143, 1
          %s377 = scalar_lea.sflag [#allocation6], %s376
          %s378 = sand.u32 %s143, 1
          %s379 = smul.addr %s378, 192
          %s380 = scalar_lea.vmem [#allocation5], %s379
          %382 = vsyncadd %s377, 0
          %s383 = smul.addr %s35, 48
          %s384 = smul.addr %s383, 4
          %s385 = scalar_lea.hbm %s5, %s384
          %s386 = sshll.u32 %s385, 4
          %s387 = int_to_ptr.hbm [resolvable:$true] %s386
          %s388 = sshll.u32 %s380, 4
          %s389 = int_to_ptr.vmem [resolvable:$true] %s388
          %394 = dma.hbm_to_vmem [thread:$0]  %s387, 3072, %s389, %s377, 192, 192, 12
        $region48: #{regression_model_forward.1} parent=35 // pred_fallthru
          _
        // Predicated region
        $region49: #{regression_model_forward.1} parent=35 // pred_check
          %p395 = pneg %p179
        $region50: #{regression_model_forward.1} parent=35 // pred_check_branch
          %397 = sbr.rel (%p395) target = $region52
        $region51: #{regression_model_forward.1} parent=35 // pred_region
          %s398 = sand.u32 %s27, 1
          %s399 = scalar_lea.sflag [#allocation8], %s398
          %s400 = sand.u32 %s169, 1
          %s401 = smul.addr %s400, 64
          %s402 = scalar_lea.vmem [#allocation7], %s401
          %404 = vsyncadd %s399, 0
          %s405 = smul.addr %s35, 16
          %s406 = smul.addr %s405, 4
          %s407 = scalar_lea.hbm %s6, %s406
          %s408 = sshll.u32 %s407, 4
          %s409 = int_to_ptr.hbm [resolvable:$true] %s408
          %s410 = sshll.u32 %s402, 4
          %s411 = int_to_ptr.vmem [resolvable:$true] %s410
          %416 = dma.hbm_to_vmem [thread:$0]  %s409, 1024, %s411, %s399, 64, 64, 4
        $region52: #{regression_model_forward.1} parent=35 // pred_fallthru
          _
        // Predicated region
        $region53: #{regression_model_forward.1} parent=35 // pred_check
          %p417 = pneg %p205
        $region54: #{regression_model_forward.1} parent=35 // pred_check_branch
          %419 = sbr.rel (%p417) target = $region56
        $region55: #{regression_model_forward.1} parent=35 // pred_region
          %s420 = sand.u32 %s27, 1
          %s421 = scalar_lea.sflag [#allocation8], %s420
          %s422 = sand.u32 %s195, 1
          %s423 = smul.addr %s422, 256
          %s424 = scalar_lea.vmem [#allocation9], %s423
          %426 = vsyncadd %s421, 0
          %s427 = smul.addr %s35, 64
          %s428 = smul.addr %s427, 4
          %s429 = scalar_lea.hbm %s7, %s428
          %s430 = sshll.u32 %s429, 4
          %s431 = int_to_ptr.hbm [resolvable:$true] %s430
          %s432 = sshll.u32 %s424, 4
          %s433 = int_to_ptr.vmem [resolvable:$true] %s432
          %438 = dma.hbm_to_vmem [thread:$0]  %s431, 4096, %s433, %s421, 256, 256, 16
        $region56: #{regression_model_forward.1} parent=35 // pred_fallthru
          _
        // Predicated region
        $region57: #{regression_model_forward.1} parent=35 // pred_check
          %p439 = pneg %p231
        $region58: #{regression_model_forward.1} parent=35 // pred_check_branch
          %441 = sbr.rel (%p439) target = $region60
        $region59: #{regression_model_forward.1} parent=35 // pred_region
          %s442 = sand.u32 %s221, 1
          %s443 = scalar_lea.sflag [#allocation11], %s442
          %s444 = sand.u32 %s221, 1
          %s445 = smul.addr %s444, 128
          %s446 = scalar_lea.vmem [#allocation10], %s445
          %448 = vsyncadd %s443, 0
          %s449 = smul.addr %s35, 32
          %s450 = smul.addr %s449, 4
          %s451 = scalar_lea.hbm %s8, %s450
          %s452 = sshll.u32 %s451, 4
          %s453 = int_to_ptr.hbm [resolvable:$true] %s452
          %s454 = sshll.u32 %s446, 4
          %s455 = int_to_ptr.vmem [resolvable:$true] %s454
          %460 = dma.hbm_to_vmem [thread:$0]  %s453, 2048, %s455, %s443, 64, 64, 4
        $region60: #{regression_model_forward.1} parent=35 // pred_fallthru
          _
      $region36: #{regression_model_forward.1} parent=5 // pred_fallthru
        _
      %p461 = scmp.le.s32.totalorder 1, %s27
      %p462 = scmp.lt.s32.totalorder %s27, 5
      %p463 = pnand %p461, %p462
      %p464 = pneg %p463
      // Predicated region
      $region61: #{regression_model_forward.1} parent=5 // pred_check
        _
      $region62: #{regression_model_forward.1} parent=5 // pred_check_branch
        %466 = sbr.rel (%p463) target = $region64
      $region63: #{regression_model_forward.1} parent=5 // pred_region
        %s467 = ssub.s32 %s27, 1
        %s468 = sand.u32 %s146, 1
        %s469 = scalar_lea.sflag [#allocation6], %s468
        %s470 = sand.u32 %s146, 1
        %s471 = smul.addr %s470, 192
        %s472 = scalar_lea.vmem [#allocation5], %s471
        // Predicated region
        $region65: #{regression_model_forward.1} parent=63 // pred_check
          %p473 = pneg %p159
        $region66: #{regression_model_forward.1} parent=63 // pred_check_branch
          %475 = sbr.rel (%p473) target = $region68
        $region67: #{regression_model_forward.1} parent=63 // pred_region
          %477 = dma.done %s469, 3072
        $region68: #{regression_model_forward.1} parent=63 // pred_fallthru
          _
        %s478 = sand.u32 %s32, 1
        %s479 = scalar_lea.sflag [#allocation8], %s478
        %s480 = sand.u32 %s172, 1
        %s481 = smul.addr %s480, 64
        %s482 = scalar_lea.vmem [#allocation7], %s481
        // Predicated region
        $region69: #{regression_model_forward.1} parent=63 // pred_check
          %p483 = pneg %p185
        $region70: #{regression_model_forward.1} parent=63 // pred_check_branch
          %485 = sbr.rel (%p483) target = $region72
        $region71: #{regression_model_forward.1} parent=63 // pred_region
          %487 = dma.done %s479, 1024
        $region72: #{regression_model_forward.1} parent=63 // pred_fallthru
          _
        %s488 = sand.u32 %s32, 1
        %s489 = scalar_lea.sflag [#allocation8], %s488
        %s490 = sand.u32 %s198, 1
        %s491 = smul.addr %s490, 256
        %s492 = scalar_lea.vmem [#allocation9], %s491
        // Predicated region
        $region73: #{regression_model_forward.1} parent=63 // pred_check
          %p493 = pneg %p211
        $region74: #{regression_model_forward.1} parent=63 // pred_check_branch
          %495 = sbr.rel (%p493) target = $region76
        $region75: #{regression_model_forward.1} parent=63 // pred_region
          %497 = dma.done %s489, 4096
        $region76: #{regression_model_forward.1} parent=63 // pred_fallthru
          _
        %s498 = sand.u32 %s224, 1
        %s499 = scalar_lea.sflag [#allocation11], %s498
        %s500 = sand.u32 %s224, 1
        %s501 = smul.addr %s500, 128
        %s502 = scalar_lea.vmem [#allocation10], %s501
        // Predicated region
        $region77: #{regression_model_forward.1} parent=63 // pred_check
          %p503 = pneg %p237
        $region78: #{regression_model_forward.1} parent=63 // pred_check_branch
          %505 = sbr.rel (%p503) target = $region80
        $region79: #{regression_model_forward.1} parent=63 // pred_region
          %507 = dma.done %s499, 2048
        $region80: #{regression_model_forward.1} parent=63 // pred_fallthru
          _
        %p508 = scmp.lt.s32.totalorder %s36, 1
        %s509 = scalar_select %p508, %s36, 1
        %s510 = scalar_lea.vmem %s1, %s509
        %p511 = pneg %p65
        %p512 = pneg %p62
        %p513 = pneg %p86
        %p514 = pneg %p83
        %p515 = pneg %p107
        %p516 = pneg %p104
        %p517 = scmp.lt.s32.totalorder %s37, 1
        %s518 = scalar_select %p517, %s37, 1
        %s519 = smul.addr %s518, 4
        %s520 = scalar_lea.vmem %s4, %s519
        %p521 = pneg %p133
        %p522 = pneg %p130
        %s523 = sand.u32 %s146, 1
        %s524 = scalar_lea.sflag [#allocation6], %s523
        %s525 = sand.u32 %s146, 1
        %s526 = smul.addr %s525, 192
        %s527 = scalar_lea.vmem [#allocation5], %s526
        %p528 = pneg %p159
        %p529 = pneg %p156
        %s530 = sand.u32 %s32, 1
        %s531 = scalar_lea.sflag [#allocation8], %s530
        %s532 = sand.u32 %s172, 1
        %s533 = smul.addr %s532, 64
        %s534 = scalar_lea.vmem [#allocation7], %s533
        %p535 = pneg %p185
        %p536 = pneg %p182
        %s537 = sand.u32 %s32, 1
        %s538 = scalar_lea.sflag [#allocation8], %s537
        %s539 = sand.u32 %s198, 1
        %s540 = smul.addr %s539, 256
        %s541 = scalar_lea.vmem [#allocation9], %s540
        %p542 = pneg %p211
        %p543 = pneg %p208
        %s544 = sand.u32 %s224, 1
        %s545 = scalar_lea.sflag [#allocation11], %s544
        %s546 = sand.u32 %s224, 1
        %s547 = smul.addr %s546, 128
        %s548 = scalar_lea.vmem [#allocation10], %s547
        %p549 = pneg %p237
        %p550 = pneg %p234
        %p551 = pneg %p258
        %p552 = pneg %p255
        %p553 = pneg %p279
        %p554 = pneg %p276
        %p555 = pneg %p300
        %p556 = pneg %p297
        %p557 = pneg %p326
        %p558 = pneg %p323
        %p559 = scmp.lt.s32.totalorder %s36, 1
        %s560 = scalar_select %p559, %s36, 1
        %s561 = smul.addr %s560, 8
        %s562 = scalar_lea.vmem %s12, %s561
        %p563 = scmp.lt.s32.totalorder %s36, 1
        %s564 = scalar_select %p563, %s36, 1
        %s565 = scalar_lea.vmem %s1, %s564
        %p566 = scmp.lt.s32.totalorder %s37, 1
        %s567 = scalar_select %p566, %s37, 1
        %s568 = smul.addr %s567, 4
        %s569 = scalar_lea.vmem %s4, %s568
        %p570 = scmp.lt.s32.totalorder %s36, 1
        %s571 = scalar_select %p570, %s36, 1
        %s572 = smul.addr %s571, 8
        %s573 = scalar_lea.vmem %s12, %s572
        %p575 = scmp.eq.s32.totalorder %s37, 0
        // Predicated region
        $region81: #{regression_model_forward.1} parent=63 // pred_check
          %p576 = pneg %p575
        $region82: #{regression_model_forward.1} parent=63 // pred_check_branch
          %578 = sbr.rel (%p576) target = $region84
        $region83: #{regression_model_forward.1} parent=63 // pred_region
          %s579 = smul.addr %s36, 4
          %s580 = scalar_lea.vmem %s0, %s579
          // Predicated region
          $region85: #{regression_model_forward.1} parent=83 // pred_check
            _
          $region86: #{regression_model_forward.1} parent=83 // pred_check_branch
            %582 = sbr.rel target = $region88
          $region87: #{regression_model_forward.1} parent=83 // pred_region
            // Predicated region
            $region100: #{regression_model_forward.1} parent=87 // pred_check
              _
            $region101: #{regression_model_forward.1} parent=87 // pred_check_branch
              %598 = sbr.rel (0) target = $region103
            $region102: #{regression_model_forward.1} parent=87 // pred_region
              %s600 = ssub.s32 16, 1
              loop: start=0, step=1, limit=1
              $region104: #{regression_model_forward.1} parent=102 // loop_pre_header
                _
              $region105: #{regression_model_forward.1} parent=102 // loop_header
                %s602 = sphi 0, %s606
                %p603 = scmp.ge.s32.totalorder %s602, 1
                %s607 = sphi %s580, %s580
                %s608 = sphi [#allocation2], [#allocation2]
              $region106: #{regression_model_forward.1} parent=102 // loop_header_branch
                %605 = sbr.rel (%p603) target = $region110
              $region107: #{regression_model_forward.1} parent=102 // loop_body
                %v609 = vld [vmem:[%s607] sm:%s600]
                %610 = vst [vmem:[%s608] sm:%s600] %v609
              $region108: #{regression_model_forward.1} parent=102 // loop_footer
                %s606 = sadd.s32 1, %s602
              $region109: #{regression_model_forward.1} parent=102 // loop_footer_branch
                %601 = sbr.rel target = $region105
              $region110: #{regression_model_forward.1} parent=102 // loop_exit
                _
            $region103: #{regression_model_forward.1} parent=87 // pred_fallthru
              _
          $region88: #{regression_model_forward.1} parent=83 // pred_fallthru
            _
          // Predicated region
          $region89: #{regression_model_forward.1} parent=83 // pred_check
            _
          $region90: #{regression_model_forward.1} parent=83 // pred_check_branch
            %584 = sbr.rel (0) target = $region92
          $region91: #{regression_model_forward.1} parent=83 // pred_region
            %s586 = ssub.s32 16, 1
            loop: start=0, step=1, limit=1
            $region93: #{regression_model_forward.1} parent=91 // loop_pre_header
              _
            $region94: #{regression_model_forward.1} parent=91 // loop_header
              %s588 = sphi 0, %s592
              %p589 = scmp.ge.s32.totalorder %s588, 1
              %s593 = sphi %s580, %s580
              %s594 = sphi [#allocation2], [#allocation2]
            $region95: #{regression_model_forward.1} parent=91 // loop_header_branch
              %591 = sbr.rel (%p589) target = $region99
            $region96: #{regression_model_forward.1} parent=91 // loop_body
              %v595 = vld [vmem:[%s593] sm:%s586]
              %596 = vst [vmem:[%s594] sm:%s586] %v595
            $region97: #{regression_model_forward.1} parent=91 // loop_footer
              %s592 = sadd.s32 1, %s588
            $region98: #{regression_model_forward.1} parent=91 // loop_footer_branch
              %587 = sbr.rel target = $region94
            $region99: #{regression_model_forward.1} parent=91 // loop_exit
              _
          $region92: #{regression_model_forward.1} parent=83 // pred_fallthru
            _
          // Predicated region
          $region111: #{regression_model_forward.1} parent=83 // pred_check
            _
          $region112: #{regression_model_forward.1} parent=83 // pred_check_branch
            %613 = sbr.rel (0) target = $region114
          $region113: #{regression_model_forward.1} parent=83 // pred_region
            %614 = vsyncadd [#allocation4], 64
          $region114: #{regression_model_forward.1} parent=83 // pred_fallthru
            _
          %v615 = vlaneseq
          %v616 = vshrl.u32 %v615, 7
          %v617 = vlaneseq
          %v618 = vand.u32 %v617, 127
          %vm619 = vcmp.le.s32.totalorder %v618, %v616
          %v620 = vsel %vm619, 0.0, -1e+09
          %v621 = vld [vmem:[%s565] sm:$0x1]
          %v623 = vperm.slane %v621, 0
          %v625 = vadd.f32 %v620, %v623
          %vm626 = vcmask 64512
          %627 = vst.msk [vmem:[#allocation3] sm:$0xff] %vm626, %v625
          %s628 = smul.u32 4, 1
          %s629 = smul.u32 %s628, 1
          %s630 = sshll.u32 %s629, 4
          %631 = dma.done [#allocation4], %s630
        $region84: #{regression_model_forward.1} parent=63 // pred_fallthru
          _
        %v632 = vld [vmem:[#allocation2] sm:$0xf]
        %v633 = vld [vmem:[%s569] sm:$0xf]
        %v634 = vunpack.c.l.bf16 %v633
        %v635 = vunpack.c.l.bf16 %v632
        %v636 = vmul.f32 %v635, %v635
        %637 = vadd.xlane.f32.xlu0 %v636
        %v638 = vpop.xlane.xlu0 %637
        %v639 = vrcp.pop 128.0
        %v640 = vmul.f32 128.0, %v639
        %v641 = vsub.f32 1.0, %v640
        %v642 = vmul.f32 %v639, %v641
        %v643 = vadd.f32 %v639, %v642
        %vm644 = vweird.f32 %v639
        %v645 = vsel %vm644, %v639, %v643
        %v646 = vmul.f32 %v638, %v645
        %v647 = vadd.f32 %v646, 1e-06
        %v648 = vrsqrt.pop %v647
        %v649 = vmul.f32 %v648, %v647
        %v650 = vmul.f32 %v649, %v648
        %v651 = vmul.f32 0.5, %v650
        %v652 = vsub.f32 1.5, %v651
        %v653 = vmul.f32 %v648, %v652
        %vm654 = vweird.f32 %v647
        %vm655 = vweird.f32 %v648
        %vm656 = vmor %vm654, %vm655
        %v657 = vsel %vm656, %v648, %v653
        %v658 = vmul.f32 %v635, %v657
        %v659 = vperm.slane %v634, 0
        %v660 = vmul.f32 %v658, %v659
        %v661 = vpack.c.bf16 %v660, %v660
        %v662 = vld [vmem:[%s472] sm:$0xff]
        %v663 = vld [vmem:[%s472 + $0x8] sm:$0xf]
        %v664 = vld [vmem:[%s472 + $0xc] sm:$0xff]
        %v665 = vld [vmem:[%s472 + $0x14] sm:$0xf]
        %v666 = vld [vmem:[%s472 + $0x18] sm:$0xff]
        %v667 = vld [vmem:[%s472 + $0x20] sm:$0xf]
        %v668 = vld [vmem:[%s472 + $0x24] sm:$0xff]
        %v669 = vld [vmem:[%s472 + $0x2c] sm:$0xf]
        %v670 = vld [vmem:[%s472 + $0x30] sm:$0xff]
        %v671 = vld [vmem:[%s472 + $0x38] sm:$0xf]
        %v672 = vld [vmem:[%s472 + $0x3c] sm:$0xff]
        %v673 = vld [vmem:[%s472 + $0x44] sm:$0xf]
        %v674 = vld [vmem:[%s472 + $0x48] sm:$0xff]
        %v675 = vld [vmem:[%s472 + $0x50] sm:$0xf]
        %v676 = vld [vmem:[%s472 + $0x54] sm:$0xff]
        %v677 = vld [vmem:[%s472 + $0x5c] sm:$0xf]
        %v678 = vld [vmem:[%s472 + $0x60] sm:$0xff]
        %v679 = vld [vmem:[%s472 + $0x68] sm:$0xf]
        %v680 = vld [vmem:[%s472 + $0x6c] sm:$0xff]
        %v681 = vld [vmem:[%s472 + $0x74] sm:$0xf]
        %v682 = vld [vmem:[%s472 + $0x78] sm:$0xff]
        %v683 = vld [vmem:[%s472 + $0x80] sm:$0xf]
        %v684 = vld [vmem:[%s472 + $0x84] sm:$0xff]
        %v685 = vld [vmem:[%s472 + $0x8c] sm:$0xf]
        %v686 = vld [vmem:[%s472 + $0x90] sm:$0xff]
        %v687 = vld [vmem:[%s472 + $0x98] sm:$0xf]
        %v688 = vld [vmem:[%s472 + $0x9c] sm:$0xff]
        %v689 = vld [vmem:[%s472 + $0xa4] sm:$0xf]
        %v690 = vld [vmem:[%s472 + $0xa8] sm:$0xff]
        %v691 = vld [vmem:[%s472 + $0xb0] sm:$0xf]
        %v692 = vld [vmem:[%s472 + $0xb4] sm:$0xff]
        %v693 = vld [vmem:[%s472 + $0xbc] sm:$0xf]
        %v726 = vunpack.c.l.b16 %v662
        %v727 = vunpack.c.h.b16 %v662
        %v728 = vunpack.c.l.b16 %v663
        %v729 = vunpack.c.l.b16 %v664
        %v730 = vunpack.c.h.b16 %v664
        %v731 = vunpack.c.l.b16 %v665
        %v732 = vunpack.c.l.b16 %v666
        %v733 = vunpack.c.h.b16 %v666
        %v734 = vunpack.c.l.b16 %v667
        %v735 = vunpack.c.l.b16 %v668
        %v736 = vunpack.c.h.b16 %v668
        %v737 = vunpack.c.l.b16 %v669
        %v738 = vunpack.c.l.b16 %v670
        %v739 = vunpack.c.h.b16 %v670
        %v740 = vunpack.c.l.b16 %v671
        %v741 = vunpack.c.l.b16 %v672
        %v742 = vunpack.c.h.b16 %v672
        %v743 = vunpack.c.l.b16 %v673
        %v744 = vunpack.c.l.b16 %v674
        %v745 = vunpack.c.h.b16 %v674
        %v746 = vunpack.c.l.b16 %v675
        %v747 = vunpack.c.l.b16 %v676
        %v748 = vunpack.c.h.b16 %v676
        %v749 = vunpack.c.l.b16 %v677
        %v750 = vunpack.c.l.b16 %v678
        %v751 = vunpack.c.h.b16 %v678
        %v752 = vunpack.c.l.b16 %v679
        %v753 = vunpack.c.l.b16 %v680
        %v754 = vunpack.c.h.b16 %v680
        %v755 = vunpack.c.l.b16 %v681
        %v756 = vunpack.c.l.b16 %v682
        %v757 = vunpack.c.h.b16 %v682
        %v758 = vunpack.c.l.b16 %v683
        %v759 = vunpack.c.l.b16 %v684
        %v760 = vunpack.c.h.b16 %v684
        %v761 = vunpack.c.l.b16 %v685
        %v762 = vunpack.c.l.b16 %v686
        %v763 = vunpack.c.h.b16 %v686
        %v764 = vunpack.c.l.b16 %v687
        %v765 = vunpack.c.l.b16 %v688
        %v766 = vunpack.c.h.b16 %v688
        %v767 = vunpack.c.l.b16 %v689
        %v768 = vunpack.c.l.b16 %v690
        %v769 = vunpack.c.h.b16 %v690
        %v770 = vunpack.c.l.b16 %v691
        %v771 = vunpack.c.l.b16 %v692
        %v772 = vunpack.c.h.b16 %v692
        %v773 = vunpack.c.l.b16 %v693
        %v774 = vpack.c.b16 %v729, %v726
        %v775 = vpack.c.b16 %v730, %v727
        %v776 = vpack.c.b16 %v731, %v728
        %v777 = vpack.c.b16 %v735, %v732
        %v778 = vpack.c.b16 %v736, %v733
        %v779 = vpack.c.b16 %v737, %v734
        %v780 = vpack.c.b16 %v741, %v738
        %v781 = vpack.c.b16 %v742, %v739
        %v782 = vpack.c.b16 %v743, %v740
        %v783 = vpack.c.b16 %v747, %v744
        %v784 = vpack.c.b16 %v748, %v745
        %v785 = vpack.c.b16 %v749, %v746
        %v786 = vpack.c.b16 %v753, %v750
        %v787 = vpack.c.b16 %v754, %v751
        %v788 = vpack.c.b16 %v755, %v752
        %v789 = vpack.c.b16 %v759, %v756
        %v790 = vpack.c.b16 %v760, %v757
        %v791 = vpack.c.b16 %v761, %v758
        %v792 = vpack.c.b16 %v765, %v762
        %v793 = vpack.c.b16 %v766, %v763
        %v794 = vpack.c.b16 %v767, %v764
        %v795 = vpack.c.b16 %v771, %v768
        %v796 = vpack.c.b16 %v772, %v769
        %v797 = vpack.c.b16 %v773, %v770
        %822 = vmatpush.bf16.msra.mxu0 %v795
        %823 = vmatpush.bf16.msra.mxu0 %v792
        %824 = vmatpush.bf16.msra.mxu0 %v789
        %825 = vmatpush.bf16.msra.mxu0 %v786
        %826 = vmatpush.bf16.msra.mxu0 %v783
        %827 = vmatpush.bf16.msra.mxu0 %v780
        %828 = vmatpush.bf16.msra.mxu0 %v777
        %829 = vmatpush.bf16.msra.mxu0 %v774
        %830 = vmatmul.bf16.gmra.mxu0 %v661
        %v831 = vpop.f32.mrf.mxu0
        %v832 = vadd.f32 0.0, %v831
        %v833 = vpop.f32.mrf.mxu0
        %834 = vdwg.mxu0
        %835 = vmatpush.bf16.msra.mxu0 %v796
        %836 = vmatpush.bf16.msra.mxu0 %v793
        %837 = vmatpush.bf16.msra.mxu0 %v790
        %838 = vmatpush.bf16.msra.mxu0 %v787
        %839 = vmatpush.bf16.msra.mxu0 %v784
        %840 = vmatpush.bf16.msra.mxu0 %v781
        %841 = vmatpush.bf16.msra.mxu0 %v778
        %842 = vmatpush.bf16.msra.mxu0 %v775
        %843 = vmatmul.bf16.gmra.mxu0 %v661
        %v844 = vpop.f32.mrf.mxu0
        %v845 = vadd.f32 0.0, %v844
        %v846 = vpop.f32.mrf.mxu0
        %847 = vdwg.mxu0
        %848 = vmatpush.bf16.msra.mxu0 %v797
        %849 = vmatpush.bf16.msra.mxu0 %v794
        %850 = vmatpush.bf16.msra.mxu0 %v791
        %851 = vmatpush.bf16.msra.mxu0 %v788
        %852 = vmatpush.bf16.msra.mxu0 %v785
        %853 = vmatpush.bf16.msra.mxu0 %v782
        %854 = vmatpush.bf16.msra.mxu0 %v779
        %855 = vmatpush.bf16.msra.mxu0 %v776
        %856 = vmatmul.bf16.gmra.mxu0 %v661
        %v857 = vpop.f32.mrf.mxu0
        %v858 = vadd.f32 0.0, %v857
        %v859 = vpop.f32.mrf.mxu0
        %860 = vdwg.mxu0
        %v861 = vperm.slane %v634, 1
        %v862 = vadd.f32 %v832, %v861
        %v863 = vmul.f32 %v862, 0.088388346
        %v864 = vperm.slane %v634, 2
        %v865 = vadd.f32 %v845, %v864
        %v866 = vperm.slane %v634, 3
        %v867 = vadd.f32 %v858, %v866
        %v868 = vld [vmem:[%s2] sm:$0xff]
        %v869 = vld [vmem:[%s3] sm:$0xff]
        %v870 = vmul.f32 %v863, %v868
        %871 = vrot.lane.b32.xlu0 %v863, 64
        %v872 = vpop.permute.xlu0 %871
        %v873 = vmul.f32 %v872, %v869
        %v874 = vadd.f32 %v870, %v873
        %v875 = vmul.f32 %v865, %v868
        %876 = vrot.lane.b32.xlu0 %v865, 64
        %v877 = vpop.permute.xlu0 %876
        %v878 = vmul.f32 %v877, %v869
        %v879 = vadd.f32 %v875, %v878
        %v880 = vpack.c.bf16 %v874, %v874
        %v881 = vpack.c.bf16 %v879, %v879
        %v882 = vpack.c.bf16 %v867, %v867
        %v883 = vld [vmem:[#allocation3] sm:$0xff]
        %884 = vmatpush.bf16.xpose.msra.mxu0 0
        %885 = vmatpush.bf16.xpose.msra.mxu0 0
        %886 = vmatpush.bf16.xpose.msra.mxu0 0
        %887 = vmatpush.bf16.xpose.msra.mxu0 0
        %888 = vmatpush.bf16.xpose.msra.mxu0 0
        %889 = vmatpush.bf16.xpose.msra.mxu0 0
        %890 = vmatpush.bf16.xpose.msra.mxu0 0
        %891 = vmatpush.bf16.xpose.msra.mxu0 %v881
        %892 = vmatmul.bf16.gmra.mxu0 %v880
        %v893 = vpop.f32.mrf.mxu0
        %v894 = vadd.f32 %v883, %v893
        %v895 = vpop.f32.mrf.mxu0
        %896 = vdwg.mxu0
        %vm897 = vcmask 64512
        %v898 = vsel %vm897, %v894, -inf
        %899 = vmax.xlane.f32.xlu0 %v898
        %v900 = vpop.xlane.xlu0 %899
        %v901 = vsub.f32 %v894, %v900
        %v902 = vmul.f32 %v901, 1.442695
        %v903 = vpow.pop %v902
        %v904 = vsel %vm897, %v903, 0.0
        %905 = vadd.xlane.f32.xlu0 %v904
        %v906 = vpop.xlane.xlu0 %905
        %v907 = vrcp.pop %v906
        %v908 = vmul.f32 %v903, %v907
        %v909 = vpack.c.bf16 %v908, %v908
        %v911 = vsel %vm897, %v909, 0
        %vm913 = vcmask 1043456
        %v915 = vsel %vm913, %v882, 0
        %917 = vmatpush.bf16.msra.mxu0 0
        %918 = vmatpush.bf16.msra.mxu0 0
        %919 = vmatpush.bf16.msra.mxu0 0
        %920 = vmatpush.bf16.msra.mxu0 0
        %921 = vmatpush.bf16.msra.mxu0 0
        %922 = vmatpush.bf16.msra.mxu0 0
        %923 = vmatpush.bf16.msra.mxu0 0
        %924 = vmatpush.bf16.msra.mxu0 %v915
        %925 = vmatmul.bf16.gmra.mxu0 %v911
        %v926 = vpop.f32.mrf.mxu0
        %v927 = vadd.f32 0.0, %v926
        %v928 = vpop.f32.mrf.mxu0
        %929 = vdwg.mxu0
        %v930 = vpack.c.bf16 %v927, %v927
        %v931 = vld [vmem:[%s482] sm:$0xf]
        %v932 = vld [vmem:[%s482 + $0x4] sm:$0xf]
        %v933 = vld [vmem:[%s482 + $0x8] sm:$0xf]
        %v934 = vld [vmem:[%s482 + $0xc] sm:$0xf]
        %v935 = vld [vmem:[%s482 + $0x10] sm:$0xf]
        %v936 = vld [vmem:[%s482 + $0x14] sm:$0xf]
        %v937 = vld [vmem:[%s482 + $0x18] sm:$0xf]
        %v938 = vld [vmem:[%s482 + $0x1c] sm:$0xf]
        %v939 = vld [vmem:[%s482 + $0x20] sm:$0xf]
        %v940 = vld [vmem:[%s482 + $0x24] sm:$0xf]
        %v941 = vld [vmem:[%s482 + $0x28] sm:$0xf]
        %v942 = vld [vmem:[%s482 + $0x2c] sm:$0xf]
        %v943 = vld [vmem:[%s482 + $0x30] sm:$0xf]
        %v944 = vld [vmem:[%s482 + $0x34] sm:$0xf]
        %v945 = vld [vmem:[%s482 + $0x38] sm:$0xf]
        %v946 = vld [vmem:[%s482 + $0x3c] sm:$0xf]
        %v963 = vunpack.c.l.b16 %v931
        %v964 = vunpack.c.l.b16 %v932
        %v965 = vunpack.c.l.b16 %v933
        %v966 = vunpack.c.l.b16 %v934
        %v967 = vunpack.c.l.b16 %v935
        %v968 = vunpack.c.l.b16 %v936
        %v969 = vunpack.c.l.b16 %v937
        %v970 = vunpack.c.l.b16 %v938
        %v971 = vunpack.c.l.b16 %v939
        %v972 = vunpack.c.l.b16 %v940
        %v973 = vunpack.c.l.b16 %v941
        %v974 = vunpack.c.l.b16 %v942
        %v975 = vunpack.c.l.b16 %v943
        %v976 = vunpack.c.l.b16 %v944
        %v977 = vunpack.c.l.b16 %v945
        %v978 = vunpack.c.l.b16 %v946
        %v979 = vpack.c.b16 %v964, %v963
        %v980 = vpack.c.b16 %v966, %v965
        %v981 = vpack.c.b16 %v968, %v967
        %v982 = vpack.c.b16 %v970, %v969
        %v983 = vpack.c.b16 %v972, %v971
        %v984 = vpack.c.b16 %v974, %v973
        %v985 = vpack.c.b16 %v976, %v975
        %v986 = vpack.c.b16 %v978, %v977
        %995 = vmatpush.bf16.msra.mxu0 %v986
        %996 = vmatpush.bf16.msra.mxu0 %v985
        %997 = vmatpush.bf16.msra.mxu0 %v984
        %998 = vmatpush.bf16.msra.mxu0 %v983
        %999 = vmatpush.bf16.msra.mxu0 %v982
        %1000 = vmatpush.bf16.msra.mxu0 %v981
        %1001 = vmatpush.bf16.msra.mxu0 %v980
        %1002 = vmatpush.bf16.msra.mxu0 %v979
        %1003 = vmatmul.bf16.gmra.mxu0 %v930
        %v1004 = vpop.f32.mrf.mxu0
        %v1005 = vadd.f32 0.0, %v1004
        %v1006 = vpop.f32.mrf.mxu0
        %1007 = vdwg.mxu0
        %v1008 = vpack.c.bf16 %v1005, %v1005
        %v1009 = vunpack.c.l.bf16 %v1008
        %v1010 = vadd.f32 %v635, %v1009
        %v1011 = vpack.c.bf16 %v1010, %v1010
        %v1012 = vunpack.c.l.bf16 %v1011
        %v1013 = vmul.f32 %v1012, %v1012
        %1014 = vadd.xlane.f32.xlu0 %v1013
        %v1015 = vpop.xlane.xlu0 %1014
        %v1016 = vmul.f32 %v1015, %v645
        %v1017 = vadd.f32 %v1016, 1e-06
        %v1018 = vrsqrt.pop %v1017
        %v1019 = vmul.f32 %v1018, %v1017
        %v1020 = vmul.f32 %v1019, %v1018
        %v1021 = vmul.f32 0.5, %v1020
        %v1022 = vsub.f32 1.5, %v1021
        %v1023 = vmul.f32 %v1018, %v1022
        %vm1024 = vweird.f32 %v1017
        %vm1025 = vweird.f32 %v1018
        %vm1026 = vmor %vm1024, %vm1025
        %v1027 = vsel %vm1026, %v1018, %v1023
        %v1028 = vmul.f32 %v1012, %v1027
        %v1029 = vperm.slane %v634, 4
        %v1030 = vmul.f32 %v1028, %v1029
        %v1031 = vpack.c.bf16 %v1030, %v1030
        %v1032 = vld [vmem:[%s492] sm:$0xff]
        %v1033 = vld [vmem:[%s492 + $0x8] sm:$0xff]
        %v1034 = vld [vmem:[%s492 + $0x10] sm:$0xff]
        %v1035 = vld [vmem:[%s492 + $0x18] sm:$0xff]
        %v1036 = vld [vmem:[%s492 + $0x20] sm:$0xff]
        %v1037 = vld [vmem:[%s492 + $0x28] sm:$0xff]
        %v1038 = vld [vmem:[%s492 + $0x30] sm:$0xff]
        %v1039 = vld [vmem:[%s492 + $0x38] sm:$0xff]
        %v1040 = vld [vmem:[%s492 + $0x40] sm:$0xff]
        %v1041 = vld [vmem:[%s492 + $0x48] sm:$0xff]
        %v1042 = vld [vmem:[%s492 + $0x50] sm:$0xff]
        %v1043 = vld [vmem:[%s492 + $0x58] sm:$0xff]
        %v1044 = vld [vmem:[%s492 + $0x60] sm:$0xff]
        %v1045 = vld [vmem:[%s492 + $0x68] sm:$0xff]
        %v1046 = vld [vmem:[%s492 + $0x70] sm:$0xff]
        %v1047 = vld [vmem:[%s492 + $0x78] sm:$0xff]
        %v1048 = vld [vmem:[%s492 + $0x80] sm:$0xff]
        %v1049 = vld [vmem:[%s492 + $0x88] sm:$0xff]
        %v1050 = vld [vmem:[%s492 + $0x90] sm:$0xff]
        %v1051 = vld [vmem:[%s492 + $0x98] sm:$0xff]
        %v1052 = vld [vmem:[%s492 + $0xa0] sm:$0xff]
        %v1053 = vld [vmem:[%s492 + $0xa8] sm:$0xff]
        %v1054 = vld [vmem:[%s492 + $0xb0] sm:$0xff]
        %v1055 = vld [vmem:[%s492 + $0xb8] sm:$0xff]
        %v1056 = vld [vmem:[%s492 + $0xc0] sm:$0xff]
        %v1057 = vld [vmem:[%s492 + $0xc8] sm:$0xff]
        %v1058 = vld [vmem:[%s492 + $0xd0] sm:$0xff]
        %v1059 = vld [vmem:[%s492 + $0xd8] sm:$0xff]
        %v1060 = vld [vmem:[%s492 + $0xe0] sm:$0xff]
        %v1061 = vld [vmem:[%s492 + $0xe8] sm:$0xff]
        %v1062 = vld [vmem:[%s492 + $0xf0] sm:$0xff]
        %v1063 = vld [vmem:[%s492 + $0xf8] sm:$0xff]
        %v1096 = vunpack.c.l.b16 %v1032
        %v1097 = vunpack.c.h.b16 %v1032
        %v1098 = vunpack.c.l.b16 %v1033
        %v1099 = vunpack.c.h.b16 %v1033
        %v1100 = vunpack.c.l.b16 %v1034
        %v1101 = vunpack.c.h.b16 %v1034
        %v1102 = vunpack.c.l.b16 %v1035
        %v1103 = vunpack.c.h.b16 %v1035
        %v1104 = vunpack.c.l.b16 %v1036
        %v1105 = vunpack.c.h.b16 %v1036
        %v1106 = vunpack.c.l.b16 %v1037
        %v1107 = vunpack.c.h.b16 %v1037
        %v1108 = vunpack.c.l.b16 %v1038
        %v1109 = vunpack.c.h.b16 %v1038
        %v1110 = vunpack.c.l.b16 %v1039
        %v1111 = vunpack.c.h.b16 %v1039
        %v1112 = vunpack.c.l.b16 %v1040
        %v1113 = vunpack.c.h.b16 %v1040
        %v1114 = vunpack.c.l.b16 %v1041
        %v1115 = vunpack.c.h.b16 %v1041
        %v1116 = vunpack.c.l.b16 %v1042
        %v1117 = vunpack.c.h.b16 %v1042
        %v1118 = vunpack.c.l.b16 %v1043
        %v1119 = vunpack.c.h.b16 %v1043
        %v1120 = vunpack.c.l.b16 %v1044
        %v1121 = vunpack.c.h.b16 %v1044
        %v1122 = vunpack.c.l.b16 %v1045
        %v1123 = vunpack.c.h.b16 %v1045
        %v1124 = vunpack.c.l.b16 %v1046
        %v1125 = vunpack.c.h.b16 %v1046
        %v1126 = vunpack.c.l.b16 %v1047
        %v1127 = vunpack.c.h.b16 %v1047
        %v1128 = vunpack.c.l.b16 %v1048
        %v1129 = vunpack.c.h.b16 %v1048
        %v1130 = vunpack.c.l.b16 %v1049
        %v1131 = vunpack.c.h.b16 %v1049
        %v1132 = vunpack.c.l.b16 %v1050
        %v1133 = vunpack.c.h.b16 %v1050
        %v1134 = vunpack.c.l.b16 %v1051
        %v1135 = vunpack.c.h.b16 %v1051
        %v1136 = vunpack.c.l.b16 %v1052
        %v1137 = vunpack.c.h.b16 %v1052
        %v1138 = vunpack.c.l.b16 %v1053
        %v1139 = vunpack.c.h.b16 %v1053
        %v1140 = vunpack.c.l.b16 %v1054
        %v1141 = vunpack.c.h.b16 %v1054
        %v1142 = vunpack.c.l.b16 %v1055
        %v1143 = vunpack.c.h.b16 %v1055
        %v1144 = vunpack.c.l.b16 %v1056
        %v1145 = vunpack.c.h.b16 %v1056
        %v1146 = vunpack.c.l.b16 %v1057
        %v1147 = vunpack.c.h.b16 %v1057
        %v1148 = vunpack.c.l.b16 %v1058
        %v1149 = vunpack.c.h.b16 %v1058
        %v1150 = vunpack.c.l.b16 %v1059
        %v1151 = vunpack.c.h.b16 %v1059
        %v1152 = vunpack.c.l.b16 %v1060
        %v1153 = vunpack.c.h.b16 %v1060
        %v1154 = vunpack.c.l.b16 %v1061
        %v1155 = vunpack.c.h.b16 %v1061
        %v1156 = vunpack.c.l.b16 %v1062
        %v1157 = vunpack.c.h.b16 %v1062
        %v1158 = vunpack.c.l.b16 %v1063
        %v1159 = vunpack.c.h.b16 %v1063
        %v1160 = vpack.c.b16 %v1100, %v1096
        %v1161 = vpack.c.b16 %v1101, %v1097
        %v1162 = vpack.c.b16 %v1102, %v1098
        %v1163 = vpack.c.b16 %v1103, %v1099
        %v1164 = vpack.c.b16 %v1108, %v1104
        %v1165 = vpack.c.b16 %v1109, %v1105
        %v1166 = vpack.c.b16 %v1110, %v1106
        %v1167 = vpack.c.b16 %v1111, %v1107
        %v1168 = vpack.c.b16 %v1116, %v1112
        %v1169 = vpack.c.b16 %v1117, %v1113
        %v1170 = vpack.c.b16 %v1118, %v1114
        %v1171 = vpack.c.b16 %v1119, %v1115
        %v1172 = vpack.c.b16 %v1124, %v1120
        %v1173 = vpack.c.b16 %v1125, %v1121
        %v1174 = vpack.c.b16 %v1126, %v1122
        %v1175 = vpack.c.b16 %v1127, %v1123
        %v1176 = vpack.c.b16 %v1132, %v1128
        %v1177 = vpack.c.b16 %v1133, %v1129
        %v1178 = vpack.c.b16 %v1134, %v1130
        %v1179 = vpack.c.b16 %v1135, %v1131
        %v1180 = vpack.c.b16 %v1140, %v1136
        %v1181 = vpack.c.b16 %v1141, %v1137
        %v1182 = vpack.c.b16 %v1142, %v1138
        %v1183 = vpack.c.b16 %v1143, %v1139
        %v1184 = vpack.c.b16 %v1148, %v1144
        %v1185 = vpack.c.b16 %v1149, %v1145
        %v1186 = vpack.c.b16 %v1150, %v1146
        %v1187 = vpack.c.b16 %v1151, %v1147
        %v1188 = vpack.c.b16 %v1156, %v1152
        %v1189 = vpack.c.b16 %v1157, %v1153
        %v1190 = vpack.c.b16 %v1158, %v1154
        %v1191 = vpack.c.b16 %v1159, %v1155
        %1224 = vmatpush.bf16.msra.mxu0 %v1188
        %1225 = vmatpush.bf16.msra.mxu0 %v1184
        %1226 = vmatpush.bf16.msra.mxu0 %v1180
        %1227 = vmatpush.bf16.msra.mxu0 %v1176
        %1228 = vmatpush.bf16.msra.mxu0 %v1172
        %1229 = vmatpush.bf16.msra.mxu0 %v1168
        %1230 = vmatpush.bf16.msra.mxu0 %v1164
        %1231 = vmatpush.bf16.msra.mxu0 %v1160
        %1232 = vmatmul.bf16.gmra.mxu0 %v1031
        %v1233 = vpop.f32.mrf.mxu0
        %v1234 = vadd.f32 0.0, %v1233
        %v1235 = vpop.f32.mrf.mxu0
        %1236 = vdwg.mxu0
        %1237 = vmatpush.bf16.msra.mxu0 %v1189
        %1238 = vmatpush.bf16.msra.mxu0 %v1185
        %1239 = vmatpush.bf16.msra.mxu0 %v1181
        %1240 = vmatpush.bf16.msra.mxu0 %v1177
        %1241 = vmatpush.bf16.msra.mxu0 %v1173
        %1242 = vmatpush.bf16.msra.mxu0 %v1169
        %1243 = vmatpush.bf16.msra.mxu0 %v1165
        %1244 = vmatpush.bf16.msra.mxu0 %v1161
        %1245 = vmatmul.bf16.gmra.mxu0 %v1031
        %v1246 = vpop.f32.mrf.mxu0
        %v1247 = vadd.f32 0.0, %v1246
        %v1248 = vpop.f32.mrf.mxu0
        %1249 = vdwg.mxu0
        %1250 = vmatpush.bf16.msra.mxu0 %v1190
        %1251 = vmatpush.bf16.msra.mxu0 %v1186
        %1252 = vmatpush.bf16.msra.mxu0 %v1182
        %1253 = vmatpush.bf16.msra.mxu0 %v1178
        %1254 = vmatpush.bf16.msra.mxu0 %v1174
        %1255 = vmatpush.bf16.msra.mxu0 %v1170
        %1256 = vmatpush.bf16.msra.mxu0 %v1166
        %1257 = vmatpush.bf16.msra.mxu0 %v1162
        %1258 = vmatmul.bf16.gmra.mxu0 %v1031
        %v1259 = vpop.f32.mrf.mxu0
        %v1260 = vadd.f32 0.0, %v1259
        %v1261 = vpop.f32.mrf.mxu0
        %1262 = vdwg.mxu0
        %1263 = vmatpush.bf16.msra.mxu0 %v1191
        %1264 = vmatpush.bf16.msra.mxu0 %v1187
        %1265 = vmatpush.bf16.msra.mxu0 %v1183
        %1266 = vmatpush.bf16.msra.mxu0 %v1179
        %1267 = vmatpush.bf16.msra.mxu0 %v1175
        %1268 = vmatpush.bf16.msra.mxu0 %v1171
        %1269 = vmatpush.bf16.msra.mxu0 %v1167
        %1270 = vmatpush.bf16.msra.mxu0 %v1163
        %1271 = vmatmul.bf16.gmra.mxu0 %v1031
        %v1272 = vpop.f32.mrf.mxu0
        %v1273 = vadd.f32 0.0, %v1272
        %v1274 = vpop.f32.mrf.mxu0
        %1275 = vdwg.mxu0
        %v1276 = vxor.u32 %v1234, 2147483648
        %v1277 = vxor.u32 %v1247, 2147483648
        %v1278 = vmul.f32 %v1276, 1.442695
        %v1279 = vpow.pop %v1278
        %v1280 = vmul.f32 %v1277, 1.442695
        %v1281 = vpow.pop %v1280
        %v1282 = vadd.f32 %v1279, 1.0
        %v1283 = vadd.f32 %v1281, 1.0
        %v1284 = vrcp.pop %v1282
        %v1285 = vmul.f32 %v1282, %v1284
        %v1286 = vsub.f32 1.0, %v1285
        %v1287 = vmul.f32 %v1284, %v1286
        %v1288 = vadd.f32 %v1284, %v1287
        %vm1289 = vweird.f32 %v1282
        %vm1290 = vweird.f32 %v1284
        %vm1291 = vmor %vm1289, %vm1290
        %v1292 = vsel %vm1291, %v1284, %v1288
        %v1293 = vand.u32 2147483647, %v1282
        %vm1294 = vcmp.eq.f32.partialorder %v1293, 8.507059e+37
        %v1295 = vand.u32 %v1282, 2147483648
        %v1296 = vor.u32 1.1754944e-38, %v1295
        %v1297 = vsel %vm1294, %v1296, %v1292
        %v1298 = vmul.f32 1.0, %v1297
        %v1299 = vrcp.pop %v1283
        %v1300 = vmul.f32 %v1283, %v1299
        %v1301 = vsub.f32 1.0, %v1300
        %v1302 = vmul.f32 %v1299, %v1301
        %v1303 = vadd.f32 %v1299, %v1302
        %vm1304 = vweird.f32 %v1283
        %vm1305 = vweird.f32 %v1299
        %vm1306 = vmor %vm1304, %vm1305
        %v1307 = vsel %vm1306, %v1299, %v1303
        %v1308 = vand.u32 2147483647, %v1283
        %vm1309 = vcmp.eq.f32.partialorder %v1308, 8.507059e+37
        %v1310 = vand.u32 %v1283, 2147483648
        %v1311 = vor.u32 1.1754944e-38, %v1310
        %v1312 = vsel %vm1309, %v1311, %v1307
        %v1313 = vmul.f32 1.0, %v1312
        %v1314 = vmul.f32 %v1234, %v1298
        %v1315 = vmul.f32 %v1247, %v1313
        %v1316 = vmul.f32 %v1314, %v1260
        %v1317 = vmul.f32 %v1315, %v1273
        %v1318 = vpack.c.bf16 %v1316, %v1316
        %v1319 = vpack.c.bf16 %v1317, %v1317
        %v1320 = vld [vmem:[%s502] sm:$0xf]
        %v1321 = vld [vmem:[%s502 + $0x4] sm:$0xf]
        %v1322 = vld [vmem:[%s502 + $0x8] sm:$0xf]
        %v1323 = vld [vmem:[%s502 + $0xc] sm:$0xf]
        %v1324 = vld [vmem:[%s502 + $0x10] sm:$0xf]
        %v1325 = vld [vmem:[%s502 + $0x14] sm:$0xf]
        %v1326 = vld [vmem:[%s502 + $0x18] sm:$0xf]
        %v1327 = vld [vmem:[%s502 + $0x1c] sm:$0xf]
        %v1328 = vld [vmem:[%s502 + $0x20] sm:$0xf]
        %v1329 = vld [vmem:[%s502 + $0x24] sm:$0xf]
        %v1330 = vld [vmem:[%s502 + $0x28] sm:$0xf]
        %v1331 = vld [vmem:[%s502 + $0x2c] sm:$0xf]
        %v1332 = vld [vmem:[%s502 + $0x30] sm:$0xf]
        %v1333 = vld [vmem:[%s502 + $0x34] sm:$0xf]
        %v1334 = vld [vmem:[%s502 + $0x38] sm:$0xf]
        %v1335 = vld [vmem:[%s502 + $0x3c] sm:$0xf]
        %v1336 = vld [vmem:[%s502 + $0x40] sm:$0xf]
        %v1337 = vld [vmem:[%s502 + $0x44] sm:$0xf]
        %v1338 = vld [vmem:[%s502 + $0x48] sm:$0xf]
        %v1339 = vld [vmem:[%s502 + $0x4c] sm:$0xf]
        %v1340 = vld [vmem:[%s502 + $0x50] sm:$0xf]
        %v1341 = vld [vmem:[%s502 + $0x54] sm:$0xf]
        %v1342 = vld [vmem:[%s502 + $0x58] sm:$0xf]
        %v1343 = vld [vmem:[%s502 + $0x5c] sm:$0xf]
        %v1344 = vld [vmem:[%s502 + $0x60] sm:$0xf]
        %v1345 = vld [vmem:[%s502 + $0x64] sm:$0xf]
        %v1346 = vld [vmem:[%s502 + $0x68] sm:$0xf]
        %v1347 = vld [vmem:[%s502 + $0x6c] sm:$0xf]
        %v1348 = vld [vmem:[%s502 + $0x70] sm:$0xf]
        %v1349 = vld [vmem:[%s502 + $0x74] sm:$0xf]
        %v1350 = vld [vmem:[%s502 + $0x78] sm:$0xf]
        %v1351 = vld [vmem:[%s502 + $0x7c] sm:$0xf]
        %v1384 = vunpack.c.l.b16 %v1320
        %v1385 = vunpack.c.l.b16 %v1321
        %v1386 = vunpack.c.l.b16 %v1322
        %v1387 = vunpack.c.l.b16 %v1323
        %v1388 = vunpack.c.l.b16 %v1324
        %v1389 = vunpack.c.l.b16 %v1325
        %v1390 = vunpack.c.l.b16 %v1326
        %v1391 = vunpack.c.l.b16 %v1327
        %v1392 = vunpack.c.l.b16 %v1328
        %v1393 = vunpack.c.l.b16 %v1329
        %v1394 = vunpack.c.l.b16 %v1330
        %v1395 = vunpack.c.l.b16 %v1331
        %v1396 = vunpack.c.l.b16 %v1332
        %v1397 = vunpack.c.l.b16 %v1333
        %v1398 = vunpack.c.l.b16 %v1334
        %v1399 = vunpack.c.l.b16 %v1335
        %v1400 = vunpack.c.l.b16 %v1336
        %v1401 = vunpack.c.l.b16 %v1337
        %v1402 = vunpack.c.l.b16 %v1338
        %v1403 = vunpack.c.l.b16 %v1339
        %v1404 = vunpack.c.l.b16 %v1340
        %v1405 = vunpack.c.l.b16 %v1341
        %v1406 = vunpack.c.l.b16 %v1342
        %v1407 = vunpack.c.l.b16 %v1343
        %v1408 = vunpack.c.l.b16 %v1344
        %v1409 = vunpack.c.l.b16 %v1345
        %v1410 = vunpack.c.l.b16 %v1346
        %v1411 = vunpack.c.l.b16 %v1347
        %v1412 = vunpack.c.l.b16 %v1348
        %v1413 = vunpack.c.l.b16 %v1349
        %v1414 = vunpack.c.l.b16 %v1350
        %v1415 = vunpack.c.l.b16 %v1351
        %v1416 = vpack.c.b16 %v1385, %v1384
        %v1417 = vpack.c.b16 %v1387, %v1386
        %v1418 = vpack.c.b16 %v1389, %v1388
        %v1419 = vpack.c.b16 %v1391, %v1390
        %v1420 = vpack.c.b16 %v1393, %v1392
        %v1421 = vpack.c.b16 %v1395, %v1394
        %v1422 = vpack.c.b16 %v1397, %v1396
        %v1423 = vpack.c.b16 %v1399, %v1398
        %v1424 = vpack.c.b16 %v1401, %v1400
        %v1425 = vpack.c.b16 %v1403, %v1402
        %v1426 = vpack.c.b16 %v1405, %v1404
        %v1427 = vpack.c.b16 %v1407, %v1406
        %v1428 = vpack.c.b16 %v1409, %v1408
        %v1429 = vpack.c.b16 %v1411, %v1410
        %v1430 = vpack.c.b16 %v1413, %v1412
        %v1431 = vpack.c.b16 %v1415, %v1414
        %1448 = vmatpush.bf16.msra.mxu0 %v1423
        %1449 = vmatpush.bf16.msra.mxu0 %v1422
        %1450 = vmatpush.bf16.msra.mxu0 %v1421
        %1451 = vmatpush.bf16.msra.mxu0 %v1420
        %1452 = vmatpush.bf16.msra.mxu0 %v1419
        %1453 = vmatpush.bf16.msra.mxu0 %v1418
        %1454 = vmatpush.bf16.msra.mxu0 %v1417
        %1455 = vmatpush.bf16.msra.mxu0 %v1416
        %1456 = vmatmul.bf16.gmra.mxu0 %v1318
        %v1457 = vpop.f32.mrf.mxu0
        %v1458 = vadd.f32 0.0, %v1457
        %v1459 = vpop.f32.mrf.mxu0
        %1460 = vdwg.mxu0
        %1461 = vmatpush.bf16.msra.mxu0 %v1431
        %1462 = vmatpush.bf16.msra.mxu0 %v1430
        %1463 = vmatpush.bf16.msra.mxu0 %v1429
        %1464 = vmatpush.bf16.msra.mxu0 %v1428
        %1465 = vmatpush.bf16.msra.mxu0 %v1427
        %1466 = vmatpush.bf16.msra.mxu0 %v1426
        %1467 = vmatpush.bf16.msra.mxu0 %v1425
        %1468 = vmatpush.bf16.msra.mxu0 %v1424
        %1469 = vmatmul.bf16.gmra.mxu0 %v1319
        %v1470 = vpop.f32.mrf.mxu0
        %v1471 = vadd.f32 %v1458, %v1470
        %v1472 = vpop.f32.mrf.mxu0
        %1473 = vdwg.mxu0
        %v1474 = vpack.c.bf16 %v1471, %v1471
        %v1475 = vunpack.c.l.bf16 %v1474
        %v1476 = vadd.f32 %v1012, %v1475
        %v1477 = vpack.c.bf16 %v1476, %v1476
        %1478 = vst [vmem:[#allocation2] sm:$0xf] %v1477
        %p1479 = scmp.eq.s32.totalorder %s37, 1
        // Predicated region
        $region115: #{regression_model_forward.1} parent=63 // pred_check
          %p1480 = pneg %p1479
        $region116: #{regression_model_forward.1} parent=63 // pred_check_branch
          %1482 = sbr.rel (%p1480) target = $region118
        $region117: #{regression_model_forward.1} parent=63 // pred_region
          %v1483 = vunpack.c.l.bf16 %v1477
          %v1484 = vmul.f32 %v1483, %v1483
          %vm1485 = vcmask 1047559
          %v1486 = vsel %vm1485, %v1484, 0.0
          %1487 = vadd.xlane.f32.xlu0 %v1486
          %v1488 = vpop.xlane.xlu0 %1487
          %v1489 = vmul.f32 %v1488, %v645
          %v1490 = vadd.f32 %v1489, 1e-06
          %v1491 = vrsqrt.pop %v1490
          %v1492 = vmul.f32 %v1491, %v1490
          %v1493 = vmul.f32 %v1492, %v1491
          %v1494 = vmul.f32 0.5, %v1493
          %v1495 = vsub.f32 1.5, %v1494
          %v1496 = vmul.f32 %v1491, %v1495
          %vm1497 = vweird.f32 %v1490
          %vm1498 = vweird.f32 %v1491
          %vm1499 = vmor %vm1497, %vm1498
          %v1500 = vsel %vm1499, %v1491, %v1496
          %v1501 = vmul.f32 %v1483, %v1500
          %v1502 = vld [vmem:[%s9] sm:$0x1]
          %v1503 = vunpack.c.l.bf16 %v1502
          %v1505 = vperm.slane %v1503, 0
          %v1507 = vmul.f32 %v1501, %v1505
          %v1508 = vpack.c.bf16 %v1507, %v1507
          %v1509 = vld [vmem:[%s10] sm:$0xf]
          %v1510 = vld [vmem:[%s10 + $0x4] sm:$0xf]
          %v1511 = vld [vmem:[%s10 + $0x8] sm:$0xf]
          %v1512 = vld [vmem:[%s10 + $0xc] sm:$0xf]
          %v1513 = vld [vmem:[%s10 + $0x10] sm:$0xf]
          %v1514 = vld [vmem:[%s10 + $0x14] sm:$0xf]
          %v1515 = vld [vmem:[%s10 + $0x18] sm:$0xf]
          %v1516 = vld [vmem:[%s10 + $0x1c] sm:$0xf]
          %v1517 = vld [vmem:[%s10 + $0x20] sm:$0xf]
          %v1518 = vld [vmem:[%s10 + $0x24] sm:$0xf]
          %v1519 = vld [vmem:[%s10 + $0x28] sm:$0xf]
          %v1520 = vld [vmem:[%s10 + $0x2c] sm:$0xf]
          %v1521 = vld [vmem:[%s10 + $0x30] sm:$0xf]
          %v1522 = vld [vmem:[%s10 + $0x34] sm:$0xf]
          %v1523 = vld [vmem:[%s10 + $0x38] sm:$0xf]
          %v1524 = vld [vmem:[%s10 + $0x3c] sm:$0xf]
          %v1525 = vld [vmem:[%s11] sm:$0x1]
          %v1526 = vunpack.c.l.bf16 %v1525
          %v1528 = vshrl.u32 %v1508, 16
          %v1530 = vrot.slane %v1528, 3
          %v1548 = vunpack.c.l.b16 %v1509
          %v1549 = vunpack.c.l.b16 %v1510
          %v1550 = vunpack.c.l.b16 %v1511
          %v1551 = vunpack.c.l.b16 %v1512
          %v1552 = vunpack.c.l.b16 %v1513
          %v1553 = vunpack.c.l.b16 %v1514
          %v1554 = vunpack.c.l.b16 %v1515
          %v1555 = vunpack.c.l.b16 %v1516
          %v1556 = vunpack.c.l.b16 %v1517
          %v1557 = vunpack.c.l.b16 %v1518
          %v1558 = vunpack.c.l.b16 %v1519
          %v1559 = vunpack.c.l.b16 %v1520
          %v1560 = vunpack.c.l.b16 %v1521
          %v1561 = vunpack.c.l.b16 %v1522
          %v1562 = vunpack.c.l.b16 %v1523
          %v1563 = vunpack.c.l.b16 %v1524
          %v1564 = vpack.c.b16 %v1549, %v1548
          %v1565 = vpack.c.b16 %v1551, %v1550
          %v1566 = vpack.c.b16 %v1553, %v1552
          %v1567 = vpack.c.b16 %v1555, %v1554
          %v1568 = vpack.c.b16 %v1557, %v1556
          %v1569 = vpack.c.b16 %v1559, %v1558
          %v1570 = vpack.c.b16 %v1561, %v1560
          %v1571 = vpack.c.b16 %v1563, %v1562
          %1580 = vmatpush.bf16.msra.mxu0 %v1571
          %1581 = vmatpush.bf16.msra.mxu0 %v1570
          %1582 = vmatpush.bf16.msra.mxu0 %v1569
          %1583 = vmatpush.bf16.msra.mxu0 %v1568
          %1584 = vmatpush.bf16.msra.mxu0 %v1567
          %1585 = vmatpush.bf16.msra.mxu0 %v1566
          %1586 = vmatpush.bf16.msra.mxu0 %v1565
          %1587 = vmatpush.bf16.msra.mxu0 %v1564
          %1588 = vmatmul.bf16.gmra.mxu0 %v1530
          %v1589 = vpop.f32.mrf.mxu0
          %v1590 = vadd.f32 %v1526, %v1589
          %v1591 = vpop.f32.mrf.mxu0
          %1592 = vdwg.mxu0
          %v1593 = vperm.slane %v1590, 0
          %1594 = vst [vmem:[%s573] sm:$0xff] %v1593
        $region118: #{regression_model_forward.1} parent=63 // pred_fallthru
          _
        %p1595 = scmp.lt.s32.totalorder %s36, 1
        %s1596 = scalar_select %p1595, %s36, 1
        %s1597 = smul.addr %s1596, 8
        %s1598 = scalar_lea.vmem %s12, %s1597
        // Predicated region
        $region119: #{regression_model_forward.1} parent=63 // pred_check
          %p1599 = pneg %p323
        $region120: #{regression_model_forward.1} parent=63 // pred_check_branch
          %1601 = sbr.rel (%p1599) target = $region122
        $region121: #{regression_model_forward.1} parent=63 // pred_region
          _
        $region122: #{regression_model_forward.1} parent=63 // pred_fallthru
          _
      $region64: #{regression_model_forward.1} parent=5 // pred_fallthru
        _
      %p1602 = scmp.le.s32.totalorder 2, %s27
      // Predicated region
      $region123: #{regression_model_forward.1} parent=5 // pred_check
        %p1603 = pneg %p1602
      $region124: #{regression_model_forward.1} parent=5 // pred_check_branch
        %1605 = sbr.rel (%p1603) target = $region126
      $region125: #{regression_model_forward.1} parent=5 // pred_region
        %s1606 = ssub.s32 %s27, 2
        // Predicated region
        $region127: #{regression_model_forward.1} parent=125 // pred_check
          %p1607 = pneg %p329
        $region128: #{regression_model_forward.1} parent=125 // pred_check_branch
          %1609 = sbr.rel (%p1607) target = $region130
        $region129: #{regression_model_forward.1} parent=125 // pred_region
          %p1610 = scmp.lt.s32.totalorder %s38, 1
          %s1611 = scalar_select %p1610, %s38, 1
          %s1612 = smul.addr %s1611, 8
          %s1613 = scalar_lea.vmem %s12, %s1612
        $region130: #{regression_model_forward.1} parent=125 // pred_fallthru
          _
      $region126: #{regression_model_forward.1} parent=5 // pred_fallthru
        _
    $region6: #{regression_model_forward.1} parent=1 // loop_footer
      %s31 = sadd.s32 1, %s27
    $region7: #{regression_model_forward.1} parent=1 // loop_footer_branch
      %26 = sbr.rel target = $region3
    $region8: #{regression_model_forward.1} parent=1 // loop_exit
      _
    %1614 = vsyncpa [#allocation6], 1
    %s1615 = scalar_lea.sflag [#allocation6], 1
    %1616 = vsyncpa %s1615, 1
    %1617 = vsyncpa [#allocation8], 1
    %s1618 = scalar_lea.sflag [#allocation8], 1
    %1619 = vsyncpa %s1618, 1
    %1620 = vsyncpa [#allocation11], 1
    %s1621 = scalar_lea.sflag [#allocation11], 1
    %1622 = vsyncpa %s1621, 1
  %1623 = vsyncmov [#allocation4]
  %s1624 = vpop.sfrf %1623
  %p1625 = scmp.eq.s32.totalorder %s1624, 0
  %p1626 = pneg %p1625
  %1628 = shalt.err (%p1626)

</llo_original>
